<compile_context>
chip_gen: v7x
topology: tpu7x:2x2x1
jax: 0.10.0
libtpu: 0.0.40
codegen_flags: <defaults>
</compile_context>

<pallas_src>
import functools

import jax
import jax.numpy as jnp
from jax import lax
from jax.experimental import pallas as pl
from jax.experimental.pallas import tpu as pltpu

EPS = 1e-5               # nn.BatchNorm1d default eps
F1, F2, NCLS = 100, 50, 10
F1P, F2P = 128, 128      # lane-padded hidden widths


def _round_up(n, m):
    return ((n + m - 1) // m) * m


def _modeld_kernel(x_ref, w1_ref, g1_ref, be1_ref,
                   w2_ref, g2_ref, be2_ref,
                   w3_ref, b3_ref,
                   out_ref,
                   *, n_valid, masked):
    """Whole-batch ModelD forward in one grid step.

    Linear biases b1/b2 are dropped in the wrapper (training-mode BatchNorm's
    mean subtraction cancels an additive per-feature bias exactly); b3 kept.
    BN uses exact two-pass full-batch statistics.  MXU operands bf16; stats,
    BN apply and log_softmax f32.
    """
    inv_b = jnp.float32(1.0 / n_valid)

    if masked:
        ridx = lax.broadcasted_iota(jnp.int32, (x_ref.shape[0], 1), 0)
        valid = ridx < n_valid

    # ---- Layer 1: a1 = x @ W1 ; BN1 (exact batch stats) ; ReLU --------------
    a1 = jnp.dot(x_ref[...], w1_ref[...], preferred_element_type=jnp.float32)
    # Padded batch rows of x are zero -> a1 is zero there -> sum/n_valid exact.
    mu1 = jnp.sum(a1, axis=0, keepdims=True) * inv_b
    c1 = a1 - mu1
    if masked:
        c1 = jnp.where(valid, c1, 0.0)      # keep padded rows out of variance
    var1 = jnp.sum(c1 * c1, axis=0, keepdims=True) * inv_b
    scale1 = g1_ref[...] * lax.rsqrt(var1 + EPS)
    h1 = jnp.maximum(c1 * scale1 + be1_ref[...], 0.0)
    if masked:
        h1 = jnp.where(valid, h1, 0.0)      # keep layer-2 stats exact
    # gamma=beta=0 on pad lanes keeps lanes 100..127 exactly zero.

    # ---- Layer 2: a2 = h1 @ W2 ; BN2 ; ReLU ---------------------------------
    a2 = jnp.dot(h1.astype(jnp.bfloat16), w2_ref[...],
                 preferred_element_type=jnp.float32)
    mu2 = jnp.sum(a2, axis=0, keepdims=True) * inv_b
    c2 = a2 - mu2
    if masked:
        c2 = jnp.where(valid, c2, 0.0)
    var2 = jnp.sum(c2 * c2, axis=0, keepdims=True) * inv_b
    scale2 = g2_ref[...] * lax.rsqrt(var2 + EPS)
    h2 = jnp.maximum(c2 * scale2 + be2_ref[...], 0.0)

    # ---- Layer 3: logits = h2 @ W3 + b3 ; log_softmax -----------------------
    logits = jnp.dot(h2.astype(jnp.bfloat16), w3_ref[...],
                     preferred_element_type=jnp.float32) + b3_ref[...]
    m = jnp.max(logits, axis=-1, keepdims=True)
    s = logits - m
    lse = jnp.log(jnp.sum(jnp.exp(s), axis=-1, keepdims=True))
    # Padded batch rows produce garbage here; the wrapper slices them off.
    out_ref[...] = (s - lse).astype(out_ref.dtype)


def modeld_forward(x, params):
    """x: [B, image_size] float32 (caller already did `.view(-1, image_size)`).
    params: init_params output (Linear weights stored as [in, out])."""
    w1, b1, g1, be1, w2, b2, g2, be2, w3, b3 = params
    del b1, b2   # exactly cancelled by training-mode BatchNorm (mean subtraction)
    B, img = x.shape

    def pad2(a, r, c):
        return jnp.pad(a, ((0, r - a.shape[0]), (0, c - a.shape[1])))

    # Lane-pad hidden dims to 128; zero weight columns and gamma=beta=0 on pad
    # lanes keep them exactly zero.  Cast MXU operands to bf16.
    w1p = pad2(w1, img, F1P).astype(jnp.bfloat16)
    w2p = pad2(w2, F1P, F2P).astype(jnp.bfloat16)
    w3p = pad2(w3, F2P, NCLS).astype(jnp.bfloat16)
    g1p, be1p = pad2(g1, 1, F1P), pad2(be1, 1, F1P)
    g2p, be2p = pad2(g2, 1, F2P), pad2(be2, 1, F2P)
    b3f = b3.astype(jnp.float32)

    # Pad the batch to a sublane multiple of 8; padded rows are masked out of
    # the BN statistics inside the kernel.
    B_pad = _round_up(B, 8)
    xp = x.astype(jnp.bfloat16)
    if B_pad != B:
        xp = jnp.pad(xp, ((0, B_pad - B), (0, 0)))

    kernel = functools.partial(_modeld_kernel, n_valid=B, masked=(B_pad != B))

    def full_block(shape):
        return pl.BlockSpec(shape, lambda i: (0,) * len(shape))

    # Rough VMEM footprint (inputs + f32 intermediates) to size the scoped limit.
    est = (B_pad * (img * 2 + (F1P + F2P) * 4 + NCLS * 4)
           + (img * F1P + F1P * F2P + F2P * NCLS) * 2 + (1 << 16))
    vmem_bytes = int(min(64 << 20, max(32 << 20, 2 * est)))

    out = pl.pallas_call(
        kernel,
        out_shape=jax.ShapeDtypeStruct((B_pad, NCLS), jnp.float32),
        grid=(1,),
        in_specs=[
            full_block((B_pad, img)),   # x  (bf16)
            full_block((img, F1P)),     # W1 (bf16)
            full_block((1, F1P)),       # gamma1
            full_block((1, F1P)),       # beta1
            full_block((F1P, F2P)),     # W2 (bf16)
            full_block((1, F2P)),       # gamma2
            full_block((1, F2P)),       # beta2
            full_block((F2P, NCLS)),    # W3 (bf16)
            full_block((1, NCLS)),      # b3 (f32)
        ],
        out_specs=full_block((B_pad, NCLS)),
        compiler_params=pltpu.CompilerParams(
            dimension_semantics=("arbitrary",),
            vmem_limit_bytes=vmem_bytes),
    )(xp, w1p, g1p, be1p, w2p, g2p, be2p, w3p, b3f)

    return out[:B]


def init_params(key, image_size):
    """Deterministic init matching PyTorch defaults.  Linear weights are stored
    as [in, out] (= W.T of nn.Linear); BN gamma=1, beta=0."""
    ks = jax.random.split(key, 6)

    def linear(kw, kb, fan_in, fan_out):
        bound = 1.0 / jnp.sqrt(fan_in)
        w = jax.random.uniform(kw, (fan_in, fan_out), jnp.float32, -bound, bound)
        b = jax.random.uniform(kb, (1, fan_out), jnp.float32, -bound, bound)
        return w, b

    w1, b1 = linear(ks[0], ks[1], image_size, F1)
    w2, b2 = linear(ks[2], ks[3], F1, F2)
    w3, b3 = linear(ks[4], ks[5], F2, NCLS)
    g1, be1 = jnp.ones((1, F1), jnp.float32), jnp.zeros((1, F1), jnp.float32)
    g2, be2 = jnp.ones((1, F2), jnp.float32), jnp.zeros((1, F2), jnp.float32)
    return (w1, b1, g1, be1, w2, b2, g2, be2, w3, b3)


def reference_forward_f32(x, params):
    """Exact PyTorch forward semantics (training-mode BN, all f32)."""
    w1, b1, g1, be1, w2, b2, g2, be2, w3, b3 = params

    def bn(h, g, be):
        mu = h.mean(0, keepdims=True)
        var = ((h - mu) ** 2).mean(0, keepdims=True)
        return (h - mu) / jnp.sqrt(var + EPS) * g + be

    h = jnp.maximum(bn(x @ w1 + b1, g1, be1), 0.0)
    h = jnp.maximum(bn(h @ w2 + b2, g2, be2), 0.0)
    return jax.nn.log_softmax(h @ w3 + b3, axis=-1)


def reference_forward_bf16(x, params):
    """Same math as the kernel: bf16 MXU operands, f32 accumulation, b1/b2
    dropped (cancelled by BN), two-pass centered BN statistics."""
    w1, b1, g1, be1, w2, b2, g2, be2, w3, b3 = params
    dot = lambda a, b: jnp.dot(a.astype(jnp.bfloat16), b.astype(jnp.bfloat16),
                               preferred_element_type=jnp.float32)

    def bn(h, g, be):
        mu = h.mean(0, keepdims=True)
        c = h - mu
        var = (c * c).mean(0, keepdims=True)
        return c * (g * lax.rsqrt(var + EPS)) + be

    h = jnp.maximum(bn(dot(x, w1), g1, be1), 0.0)
    h = jnp.maximum(bn(dot(h, w2), g2, be2), 0.0)
    return jax.nn.log_softmax(dot(h, w3) + b3, axis=-1)


if __name__ == "__main__":
    image_size = 64      # e.g. flattened 8x8 image
    key = jax.random.PRNGKey(0)
    kp, kx0, kx1, kx2 = jax.random.split(key, 4)
    params = init_params(kp, image_size)

    # batch=200: typical case; batch=13: exercises padded-row masking (pad to
    # 16 rows); batch=8: tiny single-sublane-tile case.
    for batch, kx in ((200, kx0), (13, kx2), (8, kx1)):
        x = jax.random.normal(kx, (batch, image_size), jnp.float32)
        out = jax.block_until_ready(modeld_forward(x, params))
        assert out.shape == (batch, NCLS)

        # Matched-precision reference (same bf16/f32 math): tight check.
        ref_same = reference_forward_bf16(x, params)
        assert jnp.allclose(out, ref_same, atol=2e-2, rtol=2e-2), \
            f"mismatch vs matched-precision reference (batch={batch})"

        # Full-f32 PyTorch-semantics reference: loose check (bf16 MXU error).
        ref_f32 = reference_forward_f32(x, params)
        assert jnp.allclose(out, ref_f32, atol=3e-1, rtol=0.0), \
            f"mismatch vs f32 reference (batch={batch})"

    print("KERNEL_OK")
</pallas_src>

<mosaic_0001>
module attributes {stable_mosaic.version = 11 : i64} {
  func.func @_modeld_kernel(%arg0: i32, %arg1: memref<200x64xbf16, #tpu.memory_space<vmem>>, %arg2: memref<64x128xbf16, #tpu.memory_space<vmem>>, %arg3: memref<1x128xf32, #tpu.memory_space<vmem>>, %arg4: memref<1x128xf32, #tpu.memory_space<vmem>>, %arg5: memref<128x128xbf16, #tpu.memory_space<vmem>>, %arg6: memref<1x128xf32, #tpu.memory_space<vmem>>, %arg7: memref<1x128xf32, #tpu.memory_space<vmem>>, %arg8: memref<128x10xbf16, #tpu.memory_space<vmem>>, %arg9: memref<1x10xf32, #tpu.memory_space<vmem>>, %arg10: memref<200x10xf32, #tpu.memory_space<vmem>>) attributes {dimension_semantics = [#tpu.dimension_semantics<arbitrary>], iteration_bounds = array<i64: 1>, scalar_prefetch = 0 : i64, scratch_operands = 0 : i64, tpu.core_type = #tpu.core_type<tc>, window_params = [{pipeline_mode = #tpu.pipeline_mode<synchronous>, transform_indices = @transform_0, window_bounds = array<i64: 200, 64>}, {pipeline_mode = #tpu.pipeline_mode<synchronous>, transform_indices = @transform_1, window_bounds = array<i64: 64, 128>}, {pipeline_mode = #tpu.pipeline_mode<synchronous>, transform_indices = @transform_2, window_bounds = array<i64: 1, 128>}, {pipeline_mode = #tpu.pipeline_mode<synchronous>, transform_indices = @transform_3, window_bounds = array<i64: 1, 128>}, {pipeline_mode = #tpu.pipeline_mode<synchronous>, transform_indices = @transform_4, window_bounds = array<i64: 128, 128>}, {pipeline_mode = #tpu.pipeline_mode<synchronous>, transform_indices = @transform_5, window_bounds = array<i64: 1, 128>}, {pipeline_mode = #tpu.pipeline_mode<synchronous>, transform_indices = @transform_6, window_bounds = array<i64: 1, 128>}, {pipeline_mode = #tpu.pipeline_mode<synchronous>, transform_indices = @transform_7, window_bounds = array<i64: 128, 10>}, {pipeline_mode = #tpu.pipeline_mode<synchronous>, transform_indices = @transform_8, window_bounds = array<i64: 1, 10>}, {pipeline_mode = #tpu.pipeline_mode<synchronous>, transform_indices = @transform_9, window_bounds = array<i64: 200, 10>}]} {
    %c0 = arith.constant 0 : index
    %c0_0 = arith.constant 0 : index
    %0 = vector.load %arg1[%c0, %c0_0] : memref<200x64xbf16, #tpu.memory_space<vmem>>, vector<200x64xbf16>
    %c0_1 = arith.constant 0 : index
    %c0_2 = arith.constant 0 : index
    %1 = vector.load %arg2[%c0_1, %c0_2] : memref<64x128xbf16, #tpu.memory_space<vmem>>, vector<64x128xbf16>
    %cst = arith.constant dense<0.000000e+00> : vector<200x128xf32>
    %2 = tpu.matmul %0, %1, %cst {dimension_numbers = #tpu.dot_dimension_numbers<[1], [0], [0], [1], [0, 0, 1, 1], [], []>} : vector<200x64xbf16>, vector<64x128xbf16>, vector<200x128xf32> -> vector<200x128xf32>
    %cst_3 = arith.constant dense<0.000000e+00> : vector<128xf32>
    %3 = vector.multi_reduction <add>, %2, %cst_3 [0] : vector<200x128xf32> to vector<128xf32>
    %4 = vector.shape_cast %3 : vector<128xf32> to vector<1x128xf32>
    %cst_4 = arith.constant 5.000000e-03 : f32
    %5 = vector.broadcast %cst_4 : f32 to vector<1x128xf32>
    %6 = arith.mulf %4, %5 : vector<1x128xf32>
    %7 = vector.broadcast %6 : vector<1x128xf32> to vector<200x128xf32>
    %8 = arith.subf %2, %7 : vector<200x128xf32>
    %9 = arith.mulf %8, %8 : vector<200x128xf32>
    %cst_5 = arith.constant dense<0.000000e+00> : vector<128xf32>
    %10 = vector.multi_reduction <add>, %9, %cst_5 [0] : vector<200x128xf32> to vector<128xf32>
    %11 = vector.shape_cast %10 : vector<128xf32> to vector<1x128xf32>
    %cst_6 = arith.constant 5.000000e-03 : f32
    %12 = vector.broadcast %cst_6 : f32 to vector<1x128xf32>
    %13 = arith.mulf %11, %12 : vector<1x128xf32>
    %c0_7 = arith.constant 0 : index
    %c0_8 = arith.constant 0 : index
    %14 = vector.load %arg3[%c0_7, %c0_8] : memref<1x128xf32, #tpu.memory_space<vmem>>, vector<1x128xf32>
    %cst_9 = arith.constant 9.99999974E-6 : f32
    %15 = vector.broadcast %cst_9 : f32 to vector<1x128xf32>
    %16 = arith.addf %13, %15 : vector<1x128xf32>
    %17 = math.rsqrt %16 : vector<1x128xf32>
    %18 = arith.mulf %14, %17 : vector<1x128xf32>
    %19 = vector.broadcast %18 : vector<1x128xf32> to vector<200x128xf32>
    %20 = arith.mulf %8, %19 : vector<200x128xf32>
    %c0_10 = arith.constant 0 : index
    %c0_11 = arith.constant 0 : index
    %21 = vector.load %arg4[%c0_10, %c0_11] : memref<1x128xf32, #tpu.memory_space<vmem>>, vector<1x128xf32>
    %22 = vector.broadcast %21 : vector<1x128xf32> to vector<200x128xf32>
    %23 = arith.addf %20, %22 : vector<200x128xf32>
    %cst_12 = arith.constant 0.000000e+00 : f32
    %24 = vector.broadcast %cst_12 : f32 to vector<200x128xf32>
    %25 = arith.maximumf %23, %24 : vector<200x128xf32>
    %26 = arith.truncf %25 : vector<200x128xf32> to vector<200x128xbf16>
    %c0_13 = arith.constant 0 : index
    %c0_14 = arith.constant 0 : index
    %27 = vector.load %arg5[%c0_13, %c0_14] : memref<128x128xbf16, #tpu.memory_space<vmem>>, vector<128x128xbf16>
    %cst_15 = arith.constant dense<0.000000e+00> : vector<200x128xf32>
    %28 = tpu.matmul %26, %27, %cst_15 {dimension_numbers = #tpu.dot_dimension_numbers<[1], [0], [0], [1], [0, 0, 1, 1], [], []>} : vector<200x128xbf16>, vector<128x128xbf16>, vector<200x128xf32> -> vector<200x128xf32>
    %cst_16 = arith.constant dense<0.000000e+00> : vector<128xf32>
    %29 = vector.multi_reduction <add>, %28, %cst_16 [0] : vector<200x128xf32> to vector<128xf32>
    %30 = vector.shape_cast %29 : vector<128xf32> to vector<1x128xf32>
    %cst_17 = arith.constant 5.000000e-03 : f32
    %31 = vector.broadcast %cst_17 : f32 to vector<1x128xf32>
    %32 = arith.mulf %30, %31 : vector<1x128xf32>
    %33 = vector.broadcast %32 : vector<1x128xf32> to vector<200x128xf32>
    %34 = arith.subf %28, %33 : vector<200x128xf32>
    %35 = arith.mulf %34, %34 : vector<200x128xf32>
    %cst_18 = arith.constant dense<0.000000e+00> : vector<128xf32>
    %36 = vector.multi_reduction <add>, %35, %cst_18 [0] : vector<200x128xf32> to vector<128xf32>
    %37 = vector.shape_cast %36 : vector<128xf32> to vector<1x128xf32>
    %cst_19 = arith.constant 5.000000e-03 : f32
    %38 = vector.broadcast %cst_19 : f32 to vector<1x128xf32>
    %39 = arith.mulf %37, %38 : vector<1x128xf32>
    %c0_20 = arith.constant 0 : index
    %c0_21 = arith.constant 0 : index
    %40 = vector.load %arg6[%c0_20, %c0_21] : memref<1x128xf32, #tpu.memory_space<vmem>>, vector<1x128xf32>
    %cst_22 = arith.constant 9.99999974E-6 : f32
    %41 = vector.broadcast %cst_22 : f32 to vector<1x128xf32>
    %42 = arith.addf %39, %41 : vector<1x128xf32>
    %43 = math.rsqrt %42 : vector<1x128xf32>
    %44 = arith.mulf %40, %43 : vector<1x128xf32>
    %45 = vector.broadcast %44 : vector<1x128xf32> to vector<200x128xf32>
    %46 = arith.mulf %34, %45 : vector<200x128xf32>
    %c0_23 = arith.constant 0 : index
    %c0_24 = arith.constant 0 : index
    %47 = vector.load %arg7[%c0_23, %c0_24] : memref<1x128xf32, #tpu.memory_space<vmem>>, vector<1x128xf32>
    %48 = vector.broadcast %47 : vector<1x128xf32> to vector<200x128xf32>
    %49 = arith.addf %46, %48 : vector<200x128xf32>
    %cst_25 = arith.constant 0.000000e+00 : f32
    %50 = vector.broadcast %cst_25 : f32 to vector<200x128xf32>
    %51 = arith.maximumf %49, %50 : vector<200x128xf32>
    %52 = arith.truncf %51 : vector<200x128xf32> to vector<200x128xbf16>
    %c0_26 = arith.constant 0 : index
    %c0_27 = arith.constant 0 : index
    %53 = vector.load %arg8[%c0_26, %c0_27] : memref<128x10xbf16, #tpu.memory_space<vmem>>, vector<128x10xbf16>
    %cst_28 = arith.constant dense<0.000000e+00> : vector<200x10xf32>
    %54 = tpu.matmul %52, %53, %cst_28 {dimension_numbers = #tpu.dot_dimension_numbers<[1], [0], [0], [1], [0, 0, 1, 1], [], []>} : vector<200x128xbf16>, vector<128x10xbf16>, vector<200x10xf32> -> vector<200x10xf32>
    %c0_29 = arith.constant 0 : index
    %c0_30 = arith.constant 0 : index
    %55 = vector.load %arg9[%c0_29, %c0_30] : memref<1x10xf32, #tpu.memory_space<vmem>>, vector<1x10xf32>
    %56 = vector.broadcast %55 : vector<1x10xf32> to vector<200x10xf32>
    %57 = arith.addf %54, %56 : vector<200x10xf32>
    %cst_31 = arith.constant dense<0xFF800000> : vector<200xf32>
    %58 = vector.multi_reduction <maximumf>, %57, %cst_31 [1] : vector<200x10xf32> to vector<200xf32>
    %59 = vector.shape_cast %58 : vector<200xf32> to vector<200x1xf32>
    %60 = vector.broadcast %59 : vector<200x1xf32> to vector<200x10xf32>
    %61 = arith.subf %57, %60 : vector<200x10xf32>
    %62 = math.exp %61 : vector<200x10xf32>
    %cst_32 = arith.constant dense<0.000000e+00> : vector<200xf32>
    %63 = vector.multi_reduction <add>, %62, %cst_32 [1] : vector<200x10xf32> to vector<200xf32>
    %64 = vector.shape_cast %63 : vector<200xf32> to vector<200x1xf32>
    %65 = math.log %64 : vector<200x1xf32>
    %66 = vector.broadcast %65 : vector<200x1xf32> to vector<200x10xf32>
    %67 = arith.subf %61, %66 : vector<200x10xf32>
    %c0_33 = arith.constant 0 : index
    %c0_34 = arith.constant 0 : index
    %68 = vector.load %arg10[%c0_33, %c0_34] : memref<200x10xf32, #tpu.memory_space<vmem>>, vector<200x10xf32>
    tpu.vector_store %arg10[%c0_33, %c0_34], %67 {strides = array<i32>} : memref<200x10xf32, #tpu.memory_space<vmem>>, vector<200x10xf32>,
    return
  }
  func.func @transform_0(%arg0: i32) -> (i32, i32) {
    %c0_i32 = arith.constant 0 : i32
    %c0_i32_0 = arith.constant 0 : i32
    %c0_i32_1 = arith.constant 0 : i32
    return %c0_i32, %c0_i32_0 : i32, i32
  }
  func.func @transform_1(%arg0: i32) -> (i32, i32) {
    %c0_i32 = arith.constant 0 : i32
    %c0_i32_0 = arith.constant 0 : i32
    %c0_i32_1 = arith.constant 0 : i32
    return %c0_i32, %c0_i32_0 : i32, i32
  }
  func.func @transform_2(%arg0: i32) -> (i32, i32) {
    %c0_i32 = arith.constant 0 : i32
    %c0_i32_0 = arith.constant 0 : i32
    %c0_i32_1 = arith.constant 0 : i32
    return %c0_i32, %c0_i32_0 : i32, i32
  }
  func.func @transform_3(%arg0: i32) -> (i32, i32) {
    %c0_i32 = arith.constant 0 : i32
    %c0_i32_0 = arith.constant 0 : i32
    %c0_i32_1 = arith.constant 0 : i32
    return %c0_i32, %c0_i32_0 : i32, i32
  }
  func.func @transform_4(%arg0: i32) -> (i32, i32) {
    %c0_i32 = arith.constant 0 : i32
    %c0_i32_0 = arith.constant 0 : i32
    %c0_i32_1 = arith.constant 0 : i32
    return %c0_i32, %c0_i32_0 : i32, i32
  }
  func.func @transform_5(%arg0: i32) -> (i32, i32) {
    %c0_i32 = arith.constant 0 : i32
    %c0_i32_0 = arith.constant 0 : i32
    %c0_i32_1 = arith.constant 0 : i32
    return %c0_i32, %c0_i32_0 : i32, i32
  }
  func.func @transform_6(%arg0: i32) -> (i32, i32) {
    %c0_i32 = arith.constant 0 : i32
    %c0_i32_0 = arith.constant 0 : i32
    %c0_i32_1 = arith.constant 0 : i32
    return %c0_i32, %c0_i32_0 : i32, i32
  }
  func.func @transform_7(%arg0: i32) -> (i32, i32) {
    %c0_i32 = arith.constant 0 : i32
    %c0_i32_0 = arith.constant 0 : i32
    %c0_i32_1 = arith.constant 0 : i32
    return %c0_i32, %c0_i32_0 : i32, i32
  }
  func.func @transform_8(%arg0: i32) -> (i32, i32) {
    %c0_i32 = arith.constant 0 : i32
    %c0_i32_0 = arith.constant 0 : i32
    %c0_i32_1 = arith.constant 0 : i32
    return %c0_i32, %c0_i32_0 : i32, i32
  }
  func.func @transform_9(%arg0: i32) -> (i32, i32) {
    %c0_i32 = arith.constant 0 : i32
    %c0_i32_0 = arith.constant 0 : i32
    %c0_i32_1 = arith.constant 0 : i32
    return %c0_i32, %c0_i32_0 : i32, i32
  }
}

</mosaic_0001>

<llo_original>
// kernel: tpu_custom_call.1
$region0: #{tpu_custom_call.1}
  #allocation0 [shape = 'u32[]', space=smem, size = 0x4, offset = 0x4, fixed_abs, tag = 'smem constant byte address 0x4 - core index']
  #allocation1 [shape = 'u32[144,128]{1,0:T(1,128)}', space=vmem, size = 0x12000, scoped, tag = 'internal scratch']
  %s0 = inlined_call_operand.vmem [shape: bf16[200,64], index: 0, kind: input, shape index: {}]
  %s1 = inlined_call_operand.vmem [shape: bf16[64,128], index: 1, kind: input, shape index: {}]
  %s2 = inlined_call_operand.vmem [shape: f32[1,128], index: 2, kind: input, shape index: {}]
  %s3 = inlined_call_operand.vmem [shape: f32[1,128], index: 3, kind: input, shape index: {}]
  %s4 = inlined_call_operand.vmem [shape: bf16[128,128], index: 4, kind: input, shape index: {}]
  %s5 = inlined_call_operand.vmem [shape: f32[1,128], index: 5, kind: input, shape index: {}]
  %s6 = inlined_call_operand.vmem [shape: f32[1,128], index: 6, kind: input, shape index: {}]
  %s7 = inlined_call_operand.vmem [shape: bf16[128,10], index: 7, kind: input, shape index: {}]
  %s8 = inlined_call_operand.vmem [shape: f32[1,10], index: 8, kind: input, shape index: {}]
  %s9 = inlined_call_operand.vmem [shape: f32[200,10], index: 9, kind: output, shape index: {}]
  %s10 = sld [smem:[#allocation0]]
  $region46: #{tpu_custom_call.1} parent=0
    _
  %s12 = ssub.s32 1, %s10
  %s13 = scalar_select 0, %s12, %s10
  // Predicated region
  $region2: #{tpu_custom_call.1} parent=0 // pred_check
    _
  $region3: #{tpu_custom_call.1} parent=0 // pred_check_branch
    %15 = sbr.rel (0) target = $region5
  $region4: #{tpu_custom_call.1} parent=0 // pred_region
    _
  $region5: #{tpu_custom_call.1} parent=0 // pred_fallthru
    _
  // Predicated region
  $region6: #{tpu_custom_call.1} parent=0 // pred_check
    _
  $region7: #{tpu_custom_call.1} parent=0 // pred_check_branch
    %17 = sbr.rel (0) target = $region9
  $region8: #{tpu_custom_call.1} parent=0 // pred_region
    _
  $region9: #{tpu_custom_call.1} parent=0 // pred_fallthru
    _
  // Predicated region
  $region10: #{tpu_custom_call.1} parent=0 // pred_check
    _
  $region11: #{tpu_custom_call.1} parent=0 // pred_check_branch
    %19 = sbr.rel (0) target = $region13
  $region12: #{tpu_custom_call.1} parent=0 // pred_region
    _
  $region13: #{tpu_custom_call.1} parent=0 // pred_fallthru
    _
  // Predicated region
  $region14: #{tpu_custom_call.1} parent=0 // pred_check
    _
  $region15: #{tpu_custom_call.1} parent=0 // pred_check_branch
    %21 = sbr.rel (0) target = $region17
  $region16: #{tpu_custom_call.1} parent=0 // pred_region
    _
  $region17: #{tpu_custom_call.1} parent=0 // pred_fallthru
    _
  // Predicated region
  $region18: #{tpu_custom_call.1} parent=0 // pred_check
    _
  $region19: #{tpu_custom_call.1} parent=0 // pred_check_branch
    %23 = sbr.rel (0) target = $region21
  $region20: #{tpu_custom_call.1} parent=0 // pred_region
    _
  $region21: #{tpu_custom_call.1} parent=0 // pred_fallthru
    _
  // Predicated region
  $region22: #{tpu_custom_call.1} parent=0 // pred_check
    _
  $region23: #{tpu_custom_call.1} parent=0 // pred_check_branch
    %25 = sbr.rel (0) target = $region25
  $region24: #{tpu_custom_call.1} parent=0 // pred_region
    _
  $region25: #{tpu_custom_call.1} parent=0 // pred_fallthru
    _
  // Predicated region
  $region26: #{tpu_custom_call.1} parent=0 // pred_check
    _
  $region27: #{tpu_custom_call.1} parent=0 // pred_check_branch
    %27 = sbr.rel (0) target = $region29
  $region28: #{tpu_custom_call.1} parent=0 // pred_region
    _
  $region29: #{tpu_custom_call.1} parent=0 // pred_fallthru
    _
  // Predicated region
  $region30: #{tpu_custom_call.1} parent=0 // pred_check
    _
  $region31: #{tpu_custom_call.1} parent=0 // pred_check_branch
    %29 = sbr.rel (0) target = $region33
  $region32: #{tpu_custom_call.1} parent=0 // pred_region
    _
  $region33: #{tpu_custom_call.1} parent=0 // pred_fallthru
    _
  // Predicated region
  $region34: #{tpu_custom_call.1} parent=0 // pred_check
    _
  $region35: #{tpu_custom_call.1} parent=0 // pred_check_branch
    %31 = sbr.rel (0) target = $region37
  $region36: #{tpu_custom_call.1} parent=0 // pred_region
    _
  $region37: #{tpu_custom_call.1} parent=0 // pred_fallthru
    _
  %v33 = vld [vmem:[%s0] sm:$0xf]
  %v34 = vld [vmem:[%s0 + $0x4] sm:$0xf]
  %v35 = vld [vmem:[%s0 + $0x8] sm:$0xf]
  %v36 = vld [vmem:[%s0 + $0xc] sm:$0xf]
  %v37 = vld [vmem:[%s0 + $0x10] sm:$0xf]
  %v38 = vld [vmem:[%s0 + $0x14] sm:$0xf]
  %v39 = vld [vmem:[%s0 + $0x18] sm:$0xf]
  %v40 = vld [vmem:[%s0 + $0x1c] sm:$0xf]
  %v41 = vld [vmem:[%s0 + $0x20] sm:$0xf]
  %v42 = vld [vmem:[%s0 + $0x24] sm:$0xf]
  %v43 = vld [vmem:[%s0 + $0x28] sm:$0xf]
  %v44 = vld [vmem:[%s0 + $0x2c] sm:$0xf]
  %v45 = vld [vmem:[%s0 + $0x30] sm:$0xf]
  %v46 = vld [vmem:[%s0 + $0x34] sm:$0xf]
  %v47 = vld [vmem:[%s0 + $0x38] sm:$0xf]
  %v48 = vld [vmem:[%s0 + $0x3c] sm:$0xf]
  %v49 = vld [vmem:[%s0 + $0x40] sm:$0xf]
  %v50 = vld [vmem:[%s0 + $0x44] sm:$0xf]
  %v51 = vld [vmem:[%s0 + $0x48] sm:$0xf]
  %v52 = vld [vmem:[%s0 + $0x4c] sm:$0xf]
  %v53 = vld [vmem:[%s0 + $0x50] sm:$0xf]
  %v54 = vld [vmem:[%s0 + $0x54] sm:$0xf]
  %v55 = vld [vmem:[%s0 + $0x58] sm:$0xf]
  %v56 = vld [vmem:[%s0 + $0x5c] sm:$0xf]
  %v57 = vld [vmem:[%s0 + $0x60] sm:$0xf]
  %v58 = vld [vmem:[%s1] sm:$0xf]
  %v59 = vld [vmem:[%s1 + $0x4] sm:$0xf]
  %v60 = vld [vmem:[%s1 + $0x8] sm:$0xf]
  %v61 = vld [vmem:[%s1 + $0xc] sm:$0xf]
  %v62 = vld [vmem:[%s1 + $0x10] sm:$0xf]
  %v63 = vld [vmem:[%s1 + $0x14] sm:$0xf]
  %v64 = vld [vmem:[%s1 + $0x18] sm:$0xf]
  %v65 = vld [vmem:[%s1 + $0x1c] sm:$0xf]
  %v91 = vunpack.c.l.b16 %v33
  %v92 = vunpack.c.l.b16 %v34
  %v93 = vunpack.c.l.b16 %v35
  %v94 = vunpack.c.l.b16 %v36
  %v95 = vunpack.c.l.b16 %v37
  %v96 = vunpack.c.l.b16 %v38
  %v97 = vunpack.c.l.b16 %v39
  %v98 = vunpack.c.l.b16 %v40
  %v99 = vunpack.c.l.b16 %v41
  %v100 = vunpack.c.l.b16 %v42
  %v101 = vunpack.c.l.b16 %v43
  %v102 = vunpack.c.l.b16 %v44
  %v103 = vunpack.c.l.b16 %v45
  %v104 = vunpack.c.l.b16 %v46
  %v105 = vunpack.c.l.b16 %v47
  %v106 = vunpack.c.l.b16 %v48
  %v107 = vunpack.c.l.b16 %v49
  %v108 = vunpack.c.l.b16 %v50
  %v109 = vunpack.c.l.b16 %v51
  %v110 = vunpack.c.l.b16 %v52
  %v111 = vunpack.c.l.b16 %v53
  %v112 = vunpack.c.l.b16 %v54
  %v113 = vunpack.c.l.b16 %v55
  %v114 = vunpack.c.l.b16 %v56
  %v115 = vunpack.c.l.b16 %v57
  %v116 = vpack.c.b16 %v92, %v91
  %v117 = vpack.c.b16 %v94, %v93
  %v118 = vpack.c.b16 %v96, %v95
  %v119 = vpack.c.b16 %v98, %v97
  %v120 = vpack.c.b16 %v100, %v99
  %v121 = vpack.c.b16 %v102, %v101
  %v122 = vpack.c.b16 %v104, %v103
  %v123 = vpack.c.b16 %v106, %v105
  %v124 = vpack.c.b16 %v108, %v107
  %v125 = vpack.c.b16 %v110, %v109
  %v126 = vpack.c.b16 %v112, %v111
  %v127 = vpack.c.b16 %v114, %v113
  %v128 = vpack.c.b16 %v115, %v115
  %v137 = vunpack.c.l.b16 %v58
  %v138 = vunpack.c.l.b16 %v59
  %v139 = vunpack.c.l.b16 %v60
  %v140 = vunpack.c.l.b16 %v61
  %v141 = vunpack.c.l.b16 %v62
  %v142 = vunpack.c.l.b16 %v63
  %v143 = vunpack.c.l.b16 %v64
  %v144 = vunpack.c.l.b16 %v65
  %v145 = vpack.c.b16 %v138, %v137
  %v146 = vpack.c.b16 %v140, %v139
  %v147 = vpack.c.b16 %v142, %v141
  %v148 = vpack.c.b16 %v144, %v143
  %vm153 = vcmask 523264
  %v155 = vsel %vm153, %v116, 0
  %v158 = vsel %vm153, %v117, 0
  %v161 = vsel %vm153, %v118, 0
  %v164 = vsel %vm153, %v119, 0
  %v167 = vsel %vm153, %v120, 0
  %v170 = vsel %vm153, %v121, 0
  %v173 = vsel %vm153, %v122, 0
  %v176 = vsel %vm153, %v123, 0
  %v179 = vsel %vm153, %v124, 0
  %v182 = vsel %vm153, %v125, 0
  %v185 = vsel %vm153, %v126, 0
  %v188 = vsel %vm153, %v127, 0
  %v191 = vsel %vm153, %v128, 0
  %193 = vmatprep.subr.bf16.mxu0 0
  %194 = vmatpush1.bf16.msra.mxu0 %v145
  %195 = vmatprep.subr.bf16.mxu0 0
  %196 = vmatpush1.bf16.msra.mxu0 %v146
  %197 = vmatprep.subr.bf16.mxu0 0
  %198 = vmatpush1.bf16.msra.mxu0 %v147
  %199 = vmatprep.subr.bf16.mxu0 0
  %200 = vmatpush1.bf16.msra.mxu0 %v148
  %201 = vmatprep.subr.bf16.mxu0 0
  %202 = vmatpush1.bf16.msra.mxu0 0
  %203 = vmatprep.subr.bf16.mxu0 0
  %204 = vmatpush1.bf16.msra.mxu0 0
  %205 = vmatprep.subr.bf16.mxu0 0
  %206 = vmatpush1.bf16.msra.mxu0 0
  %207 = vmatprep.subr.bf16.mxu0 0
  %208 = vmatpush1.bf16.msra.mxu0 0
  %209 = vmatprep.subr.bf16.mxu0 0
  %210 = vmatpush1.bf16.msra.mxu0 0
  %211 = vmatprep.subr.bf16.mxu0 0
  %212 = vmatpush1.bf16.msra.mxu0 0
  %213 = vmatprep.subr.bf16.mxu0 0
  %214 = vmatpush1.bf16.msra.mxu0 0
  %215 = vmatprep.subr.bf16.mxu0 0
  %216 = vmatpush1.bf16.msra.mxu0 0
  %217 = vmatprep.subr.bf16.mxu0 0
  %218 = vmatpush1.bf16.msra.mxu0 0
  %219 = vmatprep.subr.bf16.mxu0 0
  %220 = vmatpush1.bf16.msra.mxu0 0
  %221 = vmatprep.subr.bf16.mxu0 0
  %222 = vmatpush1.bf16.msra.mxu0 0
  %223 = vmatprep.subr.bf16.mxu0 0
  %224 = vmatpush1.bf16.msra.mxu0 0
  %225 = vmatprep.mubr.bf16.mxu0 0
  %226 = vmatmul.mubr.bf16.gmra.mrb[0].mxu0 %v155
  %v227 = vpop.f32.mrb[0].mxu0
  %v228 = vadd.f32 0.0, %v227
  %v229 = vpop.f32.mrb[0].mxu0
  %v230 = vpop.f32.mrb[0].mxu0
  %v231 = vadd.f32 0.0, %v230
  %v232 = vpop.f32.mrb[0].mxu0
  %233 = vmatprep.mubr.bf16.mxu0 0
  %234 = vmatmul.mubr.bf16.gmra.mrb[0].mxu0 %v158
  %v235 = vpop.f32.mrb[0].mxu0
  %v236 = vadd.f32 0.0, %v235
  %v237 = vpop.f32.mrb[0].mxu0
  %v238 = vpop.f32.mrb[0].mxu0
  %v239 = vadd.f32 0.0, %v238
  %v240 = vpop.f32.mrb[0].mxu0
  %241 = vmatprep.mubr.bf16.mxu0 0
  %242 = vmatmul.mubr.bf16.gmra.mrb[0].mxu0 %v161
  %v243 = vpop.f32.mrb[0].mxu0
  %v244 = vadd.f32 0.0, %v243
  %v245 = vpop.f32.mrb[0].mxu0
  %v246 = vpop.f32.mrb[0].mxu0
  %v247 = vadd.f32 0.0, %v246
  %v248 = vpop.f32.mrb[0].mxu0
  %249 = vmatprep.mubr.bf16.mxu0 0
  %250 = vmatmul.mubr.bf16.gmra.mrb[0].mxu0 %v164
  %v251 = vpop.f32.mrb[0].mxu0
  %v252 = vadd.f32 0.0, %v251
  %v253 = vpop.f32.mrb[0].mxu0
  %v254 = vpop.f32.mrb[0].mxu0
  %v255 = vadd.f32 0.0, %v254
  %v256 = vpop.f32.mrb[0].mxu0
  %257 = vmatprep.mubr.bf16.mxu0 0
  %258 = vmatmul.mubr.bf16.gmra.mrb[0].mxu0 %v167
  %v259 = vpop.f32.mrb[0].mxu0
  %v260 = vadd.f32 0.0, %v259
  %v261 = vpop.f32.mrb[0].mxu0
  %v262 = vpop.f32.mrb[0].mxu0
  %v263 = vadd.f32 0.0, %v262
  %v264 = vpop.f32.mrb[0].mxu0
  %265 = vmatprep.mubr.bf16.mxu0 0
  %266 = vmatmul.mubr.bf16.gmra.mrb[0].mxu0 %v170
  %v267 = vpop.f32.mrb[0].mxu0
  %v268 = vadd.f32 0.0, %v267
  %v269 = vpop.f32.mrb[0].mxu0
  %v270 = vpop.f32.mrb[0].mxu0
  %v271 = vadd.f32 0.0, %v270
  %v272 = vpop.f32.mrb[0].mxu0
  %273 = vmatprep.mubr.bf16.mxu0 0
  %274 = vmatmul.mubr.bf16.gmra.mrb[0].mxu0 %v173
  %v275 = vpop.f32.mrb[0].mxu0
  %v276 = vadd.f32 0.0, %v275
  %v277 = vpop.f32.mrb[0].mxu0
  %v278 = vpop.f32.mrb[0].mxu0
  %v279 = vadd.f32 0.0, %v278
  %v280 = vpop.f32.mrb[0].mxu0
  %281 = vmatprep.mubr.bf16.mxu0 0
  %282 = vmatmul.mubr.bf16.gmra.mrb[0].mxu0 %v176
  %v283 = vpop.f32.mrb[0].mxu0
  %v284 = vadd.f32 0.0, %v283
  %v285 = vpop.f32.mrb[0].mxu0
  %v286 = vpop.f32.mrb[0].mxu0
  %v287 = vadd.f32 0.0, %v286
  %v288 = vpop.f32.mrb[0].mxu0
  %289 = vmatprep.mubr.bf16.mxu0 0
  %290 = vmatmul.mubr.bf16.gmra.mrb[0].mxu0 %v179
  %v291 = vpop.f32.mrb[0].mxu0
  %v292 = vadd.f32 0.0, %v291
  %v293 = vpop.f32.mrb[0].mxu0
  %v294 = vpop.f32.mrb[0].mxu0
  %v295 = vadd.f32 0.0, %v294
  %v296 = vpop.f32.mrb[0].mxu0
  %297 = vmatprep.mubr.bf16.mxu0 0
  %298 = vmatmul.mubr.bf16.gmra.mrb[0].mxu0 %v182
  %v299 = vpop.f32.mrb[0].mxu0
  %v300 = vadd.f32 0.0, %v299
  %v301 = vpop.f32.mrb[0].mxu0
  %v302 = vpop.f32.mrb[0].mxu0
  %v303 = vadd.f32 0.0, %v302
  %v304 = vpop.f32.mrb[0].mxu0
  %305 = vmatprep.mubr.bf16.mxu0 0
  %306 = vmatmul.mubr.bf16.gmra.mrb[0].mxu0 %v185
  %v307 = vpop.f32.mrb[0].mxu0
  %v308 = vadd.f32 0.0, %v307
  %v309 = vpop.f32.mrb[0].mxu0
  %v310 = vpop.f32.mrb[0].mxu0
  %v311 = vadd.f32 0.0, %v310
  %v312 = vpop.f32.mrb[0].mxu0
  %313 = vmatprep.mubr.bf16.mxu0 0
  %314 = vmatmul.mubr.bf16.gmra.mrb[0].mxu0 %v188
  %v315 = vpop.f32.mrb[0].mxu0
  %v316 = vadd.f32 0.0, %v315
  %v317 = vpop.f32.mrb[0].mxu0
  %v318 = vpop.f32.mrb[0].mxu0
  %v319 = vadd.f32 0.0, %v318
  %v320 = vpop.f32.mrb[0].mxu0
  %321 = vmatprep.mubr.bf16.mxu0 0
  %322 = vmatmul.mubr.bf16.gmra.mrb[0].mxu0 %v191
  %v323 = vpop.f32.mrb[0].mxu0
  %v324 = vadd.f32 0.0, %v323
  %v325 = vpop.f32.mrb[0].mxu0
  %v326 = vpop.f32.mrb[0].mxu0
  %v327 = vpop.f32.mrb[0].mxu0
  %328 = vdwg.mxu0
  %v329 = vadd.f32 %v228, %v231
  %v330 = vadd.f32 %v329, %v236
  %v331 = vadd.f32 %v330, %v239
  %v332 = vadd.f32 %v331, %v244
  %v333 = vadd.f32 %v332, %v247
  %v334 = vadd.f32 %v333, %v252
  %v335 = vadd.f32 %v334, %v255
  %v336 = vadd.f32 %v335, %v260
  %v337 = vadd.f32 %v336, %v263
  %v338 = vadd.f32 %v337, %v268
  %v339 = vadd.f32 %v338, %v271
  %v340 = vadd.f32 %v339, %v276
  %v341 = vadd.f32 %v340, %v279
  %v342 = vadd.f32 %v341, %v284
  %v343 = vadd.f32 %v342, %v287
  %v344 = vadd.f32 %v343, %v292
  %v345 = vadd.f32 %v344, %v295
  %v346 = vadd.f32 %v345, %v300
  %v347 = vadd.f32 %v346, %v303
  %v348 = vadd.f32 %v347, %v308
  %v349 = vadd.f32 %v348, %v311
  %v350 = vadd.f32 %v349, %v316
  %v351 = vadd.f32 %v350, %v319
  %v352 = vadd.f32 %v351, %v324
  %v353 = vrot.slane %v352, 4
  %v354 = vadd.f32 %v352, %v353
  %v355 = vrot.slane %v354, 2
  %v356 = vadd.f32 %v354, %v355
  %v357 = vrot.slane %v356, 1
  %v358 = vadd.f32 %v356, %v357
  %v359 = vmul.f32 %v358, 0.005
  %v360 = vsub.f32 %v228, %v359
  %v361 = vsub.f32 %v231, %v359
  %v362 = vsub.f32 %v236, %v359
  %v363 = vsub.f32 %v239, %v359
  %v364 = vsub.f32 %v244, %v359
  %v365 = vsub.f32 %v247, %v359
  %v366 = vsub.f32 %v252, %v359
  %v367 = vsub.f32 %v255, %v359
  %v368 = vsub.f32 %v260, %v359
  %v369 = vsub.f32 %v263, %v359
  %v370 = vsub.f32 %v268, %v359
  %v371 = vsub.f32 %v271, %v359
  %v372 = vsub.f32 %v276, %v359
  %v373 = vsub.f32 %v279, %v359
  %v374 = vsub.f32 %v284, %v359
  %v375 = vsub.f32 %v287, %v359
  %v376 = vsub.f32 %v292, %v359
  %v377 = vsub.f32 %v295, %v359
  %v378 = vsub.f32 %v300, %v359
  %v379 = vsub.f32 %v303, %v359
  %v380 = vsub.f32 %v308, %v359
  %v381 = vsub.f32 %v311, %v359
  %v382 = vsub.f32 %v316, %v359
  %v383 = vsub.f32 %v319, %v359
  %v384 = vsub.f32 %v324, %v359
  %v385 = vmul.f32 %v360, %v360
  %v386 = vmul.f32 %v361, %v361
  %v387 = vmul.f32 %v362, %v362
  %v388 = vmul.f32 %v363, %v363
  %v389 = vmul.f32 %v364, %v364
  %v390 = vmul.f32 %v365, %v365
  %v391 = vmul.f32 %v366, %v366
  %v392 = vmul.f32 %v367, %v367
  %v393 = vmul.f32 %v368, %v368
  %v394 = vmul.f32 %v369, %v369
  %v395 = vmul.f32 %v370, %v370
  %v396 = vmul.f32 %v371, %v371
  %v397 = vmul.f32 %v372, %v372
  %v398 = vmul.f32 %v373, %v373
  %v399 = vmul.f32 %v374, %v374
  %v400 = vmul.f32 %v375, %v375
  %v401 = vmul.f32 %v376, %v376
  %v402 = vmul.f32 %v377, %v377
  %v403 = vmul.f32 %v378, %v378
  %v404 = vmul.f32 %v379, %v379
  %v405 = vmul.f32 %v380, %v380
  %v406 = vmul.f32 %v381, %v381
  %v407 = vmul.f32 %v382, %v382
  %v408 = vmul.f32 %v383, %v383
  %v409 = vmul.f32 %v384, %v384
  %v410 = vadd.f32 %v385, %v386
  %v411 = vadd.f32 %v410, %v387
  %v412 = vadd.f32 %v411, %v388
  %v413 = vadd.f32 %v412, %v389
  %v414 = vadd.f32 %v413, %v390
  %v415 = vadd.f32 %v414, %v391
  %v416 = vadd.f32 %v415, %v392
  %v417 = vadd.f32 %v416, %v393
  %v418 = vadd.f32 %v417, %v394
  %v419 = vadd.f32 %v418, %v395
  %v420 = vadd.f32 %v419, %v396
  %v421 = vadd.f32 %v420, %v397
  %v422 = vadd.f32 %v421, %v398
  %v423 = vadd.f32 %v422, %v399
  %v424 = vadd.f32 %v423, %v400
  %v425 = vadd.f32 %v424, %v401
  %v426 = vadd.f32 %v425, %v402
  %v427 = vadd.f32 %v426, %v403
  %v428 = vadd.f32 %v427, %v404
  %v429 = vadd.f32 %v428, %v405
  %v430 = vadd.f32 %v429, %v406
  %v431 = vadd.f32 %v430, %v407
  %v432 = vadd.f32 %v431, %v408
  %v433 = vadd.f32 %v432, %v409
  %v434 = vrot.slane %v433, 4
  %v435 = vadd.f32 %v433, %v434
  %v436 = vrot.slane %v435, 2
  %v437 = vadd.f32 %v435, %v436
  %v438 = vrot.slane %v437, 1
  %v439 = vadd.f32 %v437, %v438
  %v440 = vmul.f32 %v439, 0.005
  %v441 = vld [vmem:[%s2] sm:$0x1]
  %v442 = vadd.f32 %v440, 1e-05
  %v443 = vrsqrt.pop %v442
  %v444 = vmul.f32 %v441, %v443
  %v446 = vlaneseq
  %v447 = vshrl.u32 %v446, 7
  %v448 = vsub.s32 0, %v447
  %v449 = vrot.slane %v444, %v448
  %v451 = vmul.f32 %v360, %v449
  %v452 = vmul.f32 %v361, %v449
  %v453 = vmul.f32 %v362, %v449
  %v454 = vmul.f32 %v363, %v449
  %v455 = vmul.f32 %v364, %v449
  %v456 = vmul.f32 %v365, %v449
  %v457 = vmul.f32 %v366, %v449
  %v458 = vmul.f32 %v367, %v449
  %v459 = vmul.f32 %v368, %v449
  %v460 = vmul.f32 %v369, %v449
  %v461 = vmul.f32 %v370, %v449
  %v462 = vmul.f32 %v371, %v449
  %v463 = vmul.f32 %v372, %v449
  %v464 = vmul.f32 %v373, %v449
  %v465 = vmul.f32 %v374, %v449
  %v466 = vmul.f32 %v375, %v449
  %v467 = vmul.f32 %v376, %v449
  %v468 = vmul.f32 %v377, %v449
  %v469 = vmul.f32 %v378, %v449
  %v470 = vmul.f32 %v379, %v449
  %v471 = vmul.f32 %v380, %v449
  %v472 = vmul.f32 %v381, %v449
  %v473 = vmul.f32 %v382, %v449
  %v474 = vmul.f32 %v383, %v449
  %v475 = vmul.f32 %v384, %v449
  %v476 = vld [vmem:[%s3] sm:$0x1]
  %v478 = vlaneseq
  %v479 = vshrl.u32 %v478, 7
  %v480 = vsub.s32 0, %v479
  %v481 = vrot.slane %v476, %v480
  %v483 = vadd.f32 %v451, %v481
  %v484 = vadd.f32 %v452, %v481
  %v485 = vadd.f32 %v453, %v481
  %v486 = vadd.f32 %v454, %v481
  %v487 = vadd.f32 %v455, %v481
  %v488 = vadd.f32 %v456, %v481
  %v489 = vadd.f32 %v457, %v481
  %v490 = vadd.f32 %v458, %v481
  %v491 = vadd.f32 %v459, %v481
  %v492 = vadd.f32 %v460, %v481
  %v493 = vadd.f32 %v461, %v481
  %v494 = vadd.f32 %v462, %v481
  %v495 = vadd.f32 %v463, %v481
  %v496 = vadd.f32 %v464, %v481
  %v497 = vadd.f32 %v465, %v481
  %v498 = vadd.f32 %v466, %v481
  %v499 = vadd.f32 %v467, %v481
  %v500 = vadd.f32 %v468, %v481
  %v501 = vadd.f32 %v469, %v481
  %v502 = vadd.f32 %v470, %v481
  %v503 = vadd.f32 %v471, %v481
  %v504 = vadd.f32 %v472, %v481
  %v505 = vadd.f32 %v473, %v481
  %v506 = vadd.f32 %v474, %v481
  %v507 = vadd.f32 %v475, %v481
  %v508 = vmax.f32 %v483, 0.0
  %v509 = vmax.f32 %v484, 0.0
  %v510 = vmax.f32 %v485, 0.0
  %v511 = vmax.f32 %v486, 0.0
  %v512 = vmax.f32 %v487, 0.0
  %v513 = vmax.f32 %v488, 0.0
  %v514 = vmax.f32 %v489, 0.0
  %v515 = vmax.f32 %v490, 0.0
  %v516 = vmax.f32 %v491, 0.0
  %v517 = vmax.f32 %v492, 0.0
  %v518 = vmax.f32 %v493, 0.0
  %v519 = vmax.f32 %v494, 0.0
  %v520 = vmax.f32 %v495, 0.0
  %v521 = vmax.f32 %v496, 0.0
  %v522 = vmax.f32 %v497, 0.0
  %v523 = vmax.f32 %v498, 0.0
  %v524 = vmax.f32 %v499, 0.0
  %v525 = vmax.f32 %v500, 0.0
  %v526 = vmax.f32 %v501, 0.0
  %v527 = vmax.f32 %v502, 0.0
  %v528 = vmax.f32 %v503, 0.0
  %v529 = vmax.f32 %v504, 0.0
  %v530 = vmax.f32 %v505, 0.0
  %v531 = vmax.f32 %v506, 0.0
  %v532 = vmax.f32 %v507, 0.0
  %v533 = vpack.c.bf16 %v509, %v508
  %v534 = vpack.c.bf16 %v511, %v510
  %v535 = vpack.c.bf16 %v513, %v512
  %v536 = vpack.c.bf16 %v515, %v514
  %v537 = vpack.c.bf16 %v517, %v516
  %v538 = vpack.c.bf16 %v519, %v518
  %v539 = vpack.c.bf16 %v521, %v520
  %v540 = vpack.c.bf16 %v523, %v522
  %v541 = vpack.c.bf16 %v525, %v524
  %v542 = vpack.c.bf16 %v527, %v526
  %v543 = vpack.c.bf16 %v529, %v528
  %v544 = vpack.c.bf16 %v531, %v530
  %v545 = vpack.c.bf16 %v532, %v532
  %v546 = vld [vmem:[%s4] sm:$0xf]
  %v547 = vld [vmem:[%s4 + $0x4] sm:$0xf]
  %v548 = vld [vmem:[%s4 + $0x8] sm:$0xf]
  %v549 = vld [vmem:[%s4 + $0xc] sm:$0xf]
  %v550 = vld [vmem:[%s4 + $0x10] sm:$0xf]
  %v551 = vld [vmem:[%s4 + $0x14] sm:$0xf]
  %v552 = vld [vmem:[%s4 + $0x18] sm:$0xf]
  %v553 = vld [vmem:[%s4 + $0x1c] sm:$0xf]
  %v554 = vld [vmem:[%s4 + $0x20] sm:$0xf]
  %v555 = vld [vmem:[%s4 + $0x24] sm:$0xf]
  %v556 = vld [vmem:[%s4 + $0x28] sm:$0xf]
  %v557 = vld [vmem:[%s4 + $0x2c] sm:$0xf]
  %v558 = vld [vmem:[%s4 + $0x30] sm:$0xf]
  %v559 = vld [vmem:[%s4 + $0x34] sm:$0xf]
  %v560 = vld [vmem:[%s4 + $0x38] sm:$0xf]
  %v561 = vld [vmem:[%s4 + $0x3c] sm:$0xf]
  %v578 = vunpack.c.l.b16 %v546
  %v579 = vunpack.c.l.b16 %v547
  %v580 = vunpack.c.l.b16 %v548
  %v581 = vunpack.c.l.b16 %v549
  %v582 = vunpack.c.l.b16 %v550
  %v583 = vunpack.c.l.b16 %v551
  %v584 = vunpack.c.l.b16 %v552
  %v585 = vunpack.c.l.b16 %v553
  %v586 = vunpack.c.l.b16 %v554
  %v587 = vunpack.c.l.b16 %v555
  %v588 = vunpack.c.l.b16 %v556
  %v589 = vunpack.c.l.b16 %v557
  %v590 = vunpack.c.l.b16 %v558
  %v591 = vunpack.c.l.b16 %v559
  %v592 = vunpack.c.l.b16 %v560
  %v593 = vunpack.c.l.b16 %v561
  %v594 = vpack.c.b16 %v579, %v578
  %v595 = vpack.c.b16 %v581, %v580
  %v596 = vpack.c.b16 %v583, %v582
  %v597 = vpack.c.b16 %v585, %v584
  %v598 = vpack.c.b16 %v587, %v586
  %v599 = vpack.c.b16 %v589, %v588
  %v600 = vpack.c.b16 %v591, %v590
  %v601 = vpack.c.b16 %v593, %v592
  %610 = vmatprep.subr.bf16.mxu0 0
  %611 = vmatpush1.bf16.msra.mxu0 %v594
  %612 = vmatprep.subr.bf16.mxu0 0
  %613 = vmatpush1.bf16.msra.mxu0 %v595
  %614 = vmatprep.subr.bf16.mxu0 0
  %615 = vmatpush1.bf16.msra.mxu0 %v596
  %616 = vmatprep.subr.bf16.mxu0 0
  %617 = vmatpush1.bf16.msra.mxu0 %v597
  %618 = vmatprep.subr.bf16.mxu0 0
  %619 = vmatpush1.bf16.msra.mxu0 %v598
  %620 = vmatprep.subr.bf16.mxu0 0
  %621 = vmatpush1.bf16.msra.mxu0 %v599
  %622 = vmatprep.subr.bf16.mxu0 0
  %623 = vmatpush1.bf16.msra.mxu0 %v600
  %624 = vmatprep.subr.bf16.mxu0 0
  %625 = vmatpush1.bf16.msra.mxu0 %v601
  %626 = vmatprep.subr.bf16.mxu0 0
  %627 = vmatpush1.bf16.msra.mxu0 0
  %628 = vmatprep.subr.bf16.mxu0 0
  %629 = vmatpush1.bf16.msra.mxu0 0
  %630 = vmatprep.subr.bf16.mxu0 0
  %631 = vmatpush1.bf16.msra.mxu0 0
  %632 = vmatprep.subr.bf16.mxu0 0
  %633 = vmatpush1.bf16.msra.mxu0 0
  %634 = vmatprep.subr.bf16.mxu0 0
  %635 = vmatpush1.bf16.msra.mxu0 0
  %636 = vmatprep.subr.bf16.mxu0 0
  %637 = vmatpush1.bf16.msra.mxu0 0
  %638 = vmatprep.subr.bf16.mxu0 0
  %639 = vmatpush1.bf16.msra.mxu0 0
  %640 = vmatprep.subr.bf16.mxu0 0
  %641 = vmatpush1.bf16.msra.mxu0 0
  %642 = vmatprep.mubr.bf16.mxu0 0
  %643 = vmatmul.mubr.bf16.gmra.mrb[0].mxu0 %v533
  %v644 = vpop.f32.mrb[0].mxu0
  %v645 = vadd.f32 0.0, %v644
  %v646 = vpop.f32.mrb[0].mxu0
  %v647 = vpop.f32.mrb[0].mxu0
  %v648 = vadd.f32 0.0, %v647
  %v649 = vpop.f32.mrb[0].mxu0
  %650 = vmatprep.mubr.bf16.mxu0 0
  %651 = vmatmul.mubr.bf16.gmra.mrb[0].mxu0 %v534
  %v652 = vpop.f32.mrb[0].mxu0
  %v653 = vadd.f32 0.0, %v652
  %v654 = vpop.f32.mrb[0].mxu0
  %v655 = vpop.f32.mrb[0].mxu0
  %v656 = vadd.f32 0.0, %v655
  %v657 = vpop.f32.mrb[0].mxu0
  %658 = vmatprep.mubr.bf16.mxu0 0
  %659 = vmatmul.mubr.bf16.gmra.mrb[0].mxu0 %v535
  %v660 = vpop.f32.mrb[0].mxu0
  %v661 = vadd.f32 0.0, %v660
  %v662 = vpop.f32.mrb[0].mxu0
  %v663 = vpop.f32.mrb[0].mxu0
  %v664 = vadd.f32 0.0, %v663
  %v665 = vpop.f32.mrb[0].mxu0
  %666 = vmatprep.mubr.bf16.mxu0 0
  %667 = vmatmul.mubr.bf16.gmra.mrb[0].mxu0 %v536
  %v668 = vpop.f32.mrb[0].mxu0
  %v669 = vadd.f32 0.0, %v668
  %v670 = vpop.f32.mrb[0].mxu0
  %v671 = vpop.f32.mrb[0].mxu0
  %v672 = vadd.f32 0.0, %v671
  %v673 = vpop.f32.mrb[0].mxu0
  %674 = vmatprep.mubr.bf16.mxu0 0
  %675 = vmatmul.mubr.bf16.gmra.mrb[0].mxu0 %v537
  %v676 = vpop.f32.mrb[0].mxu0
  %v677 = vadd.f32 0.0, %v676
  %v678 = vpop.f32.mrb[0].mxu0
  %v679 = vpop.f32.mrb[0].mxu0
  %v680 = vadd.f32 0.0, %v679
  %v681 = vpop.f32.mrb[0].mxu0
  %682 = vmatprep.mubr.bf16.mxu0 0
  %683 = vmatmul.mubr.bf16.gmra.mrb[0].mxu0 %v538
  %v684 = vpop.f32.mrb[0].mxu0
  %v685 = vadd.f32 0.0, %v684
  %v686 = vpop.f32.mrb[0].mxu0
  %v687 = vpop.f32.mrb[0].mxu0
  %v688 = vadd.f32 0.0, %v687
  %v689 = vpop.f32.mrb[0].mxu0
  %690 = vmatprep.mubr.bf16.mxu0 0
  %691 = vmatmul.mubr.bf16.gmra.mrb[0].mxu0 %v539
  %v692 = vpop.f32.mrb[0].mxu0
  %v693 = vadd.f32 0.0, %v692
  %v694 = vpop.f32.mrb[0].mxu0
  %v695 = vpop.f32.mrb[0].mxu0
  %v696 = vadd.f32 0.0, %v695
  %v697 = vpop.f32.mrb[0].mxu0
  %698 = vmatprep.mubr.bf16.mxu0 0
  %699 = vmatmul.mubr.bf16.gmra.mrb[0].mxu0 %v540
  %v700 = vpop.f32.mrb[0].mxu0
  %v701 = vadd.f32 0.0, %v700
  %v702 = vpop.f32.mrb[0].mxu0
  %v703 = vpop.f32.mrb[0].mxu0
  %v704 = vadd.f32 0.0, %v703
  %v705 = vpop.f32.mrb[0].mxu0
  %706 = vmatprep.mubr.bf16.mxu0 0
  %707 = vmatmul.mubr.bf16.gmra.mrb[0].mxu0 %v541
  %v708 = vpop.f32.mrb[0].mxu0
  %v709 = vadd.f32 0.0, %v708
  %v710 = vpop.f32.mrb[0].mxu0
  %v711 = vpop.f32.mrb[0].mxu0
  %v712 = vadd.f32 0.0, %v711
  %v713 = vpop.f32.mrb[0].mxu0
  %714 = vmatprep.mubr.bf16.mxu0 0
  %715 = vmatmul.mubr.bf16.gmra.mrb[0].mxu0 %v542
  %v716 = vpop.f32.mrb[0].mxu0
  %v717 = vadd.f32 0.0, %v716
  %v718 = vpop.f32.mrb[0].mxu0
  %v719 = vpop.f32.mrb[0].mxu0
  %v720 = vadd.f32 0.0, %v719
  %v721 = vpop.f32.mrb[0].mxu0
  %722 = vmatprep.mubr.bf16.mxu0 0
  %723 = vmatmul.mubr.bf16.gmra.mrb[0].mxu0 %v543
  %v724 = vpop.f32.mrb[0].mxu0
  %v725 = vadd.f32 0.0, %v724
  %v726 = vpop.f32.mrb[0].mxu0
  %v727 = vpop.f32.mrb[0].mxu0
  %v728 = vadd.f32 0.0, %v727
  %v729 = vpop.f32.mrb[0].mxu0
  %730 = vmatprep.mubr.bf16.mxu0 0
  %731 = vmatmul.mubr.bf16.gmra.mrb[0].mxu0 %v544
  %v732 = vpop.f32.mrb[0].mxu0
  %v733 = vadd.f32 0.0, %v732
  %v734 = vpop.f32.mrb[0].mxu0
  %v735 = vpop.f32.mrb[0].mxu0
  %v736 = vadd.f32 0.0, %v735
  %v737 = vpop.f32.mrb[0].mxu0
  %738 = vmatprep.mubr.bf16.mxu0 0
  %739 = vmatmul.mubr.bf16.gmra.mrb[0].mxu0 %v545
  %v740 = vpop.f32.mrb[0].mxu0
  %v741 = vadd.f32 0.0, %v740
  %v742 = vpop.f32.mrb[0].mxu0
  %v743 = vpop.f32.mrb[0].mxu0
  %v744 = vpop.f32.mrb[0].mxu0
  %745 = vdwg.mxu0
  %v746 = vadd.f32 %v645, %v648
  %v747 = vadd.f32 %v746, %v653
  %v748 = vadd.f32 %v747, %v656
  %v749 = vadd.f32 %v748, %v661
  %v750 = vadd.f32 %v749, %v664
  %v751 = vadd.f32 %v750, %v669
  %v752 = vadd.f32 %v751, %v672
  %v753 = vadd.f32 %v752, %v677
  %v754 = vadd.f32 %v753, %v680
  %v755 = vadd.f32 %v754, %v685
  %v756 = vadd.f32 %v755, %v688
  %v757 = vadd.f32 %v756, %v693
  %v758 = vadd.f32 %v757, %v696
  %v759 = vadd.f32 %v758, %v701
  %v760 = vadd.f32 %v759, %v704
  %v761 = vadd.f32 %v760, %v709
  %v762 = vadd.f32 %v761, %v712
  %v763 = vadd.f32 %v762, %v717
  %v764 = vadd.f32 %v763, %v720
  %v765 = vadd.f32 %v764, %v725
  %v766 = vadd.f32 %v765, %v728
  %v767 = vadd.f32 %v766, %v733
  %v768 = vadd.f32 %v767, %v736
  %v769 = vadd.f32 %v768, %v741
  %v770 = vrot.slane %v769, 4
  %v771 = vadd.f32 %v769, %v770
  %v772 = vrot.slane %v771, 2
  %v773 = vadd.f32 %v771, %v772
  %v774 = vrot.slane %v773, 1
  %v775 = vadd.f32 %v773, %v774
  %v776 = vmul.f32 %v775, 0.005
  %v777 = vsub.f32 %v645, %v776
  %v778 = vsub.f32 %v648, %v776
  %v779 = vsub.f32 %v653, %v776
  %v780 = vsub.f32 %v656, %v776
  %v781 = vsub.f32 %v661, %v776
  %v782 = vsub.f32 %v664, %v776
  %v783 = vsub.f32 %v669, %v776
  %v784 = vsub.f32 %v672, %v776
  %v785 = vsub.f32 %v677, %v776
  %v786 = vsub.f32 %v680, %v776
  %v787 = vsub.f32 %v685, %v776
  %v788 = vsub.f32 %v688, %v776
  %v789 = vsub.f32 %v693, %v776
  %v790 = vsub.f32 %v696, %v776
  %v791 = vsub.f32 %v701, %v776
  %v792 = vsub.f32 %v704, %v776
  %v793 = vsub.f32 %v709, %v776
  %v794 = vsub.f32 %v712, %v776
  %v795 = vsub.f32 %v717, %v776
  %v796 = vsub.f32 %v720, %v776
  %v797 = vsub.f32 %v725, %v776
  %v798 = vsub.f32 %v728, %v776
  %v799 = vsub.f32 %v733, %v776
  %v800 = vsub.f32 %v736, %v776
  %v801 = vsub.f32 %v741, %v776
  %v802 = vmul.f32 %v777, %v777
  %v803 = vmul.f32 %v778, %v778
  %v804 = vmul.f32 %v779, %v779
  %v805 = vmul.f32 %v780, %v780
  %v806 = vmul.f32 %v781, %v781
  %v807 = vmul.f32 %v782, %v782
  %v808 = vmul.f32 %v783, %v783
  %v809 = vmul.f32 %v784, %v784
  %v810 = vmul.f32 %v785, %v785
  %v811 = vmul.f32 %v786, %v786
  %v812 = vmul.f32 %v787, %v787
  %v813 = vmul.f32 %v788, %v788
  %v814 = vmul.f32 %v789, %v789
  %v815 = vmul.f32 %v790, %v790
  %v816 = vmul.f32 %v791, %v791
  %v817 = vmul.f32 %v792, %v792
  %v818 = vmul.f32 %v793, %v793
  %v819 = vmul.f32 %v794, %v794
  %v820 = vmul.f32 %v795, %v795
  %v821 = vmul.f32 %v796, %v796
  %v822 = vmul.f32 %v797, %v797
  %v823 = vmul.f32 %v798, %v798
  %v824 = vmul.f32 %v799, %v799
  %v825 = vmul.f32 %v800, %v800
  %v826 = vmul.f32 %v801, %v801
  %v827 = vadd.f32 %v802, %v803
  %v828 = vadd.f32 %v827, %v804
  %v829 = vadd.f32 %v828, %v805
  %v830 = vadd.f32 %v829, %v806
  %v831 = vadd.f32 %v830, %v807
  %v832 = vadd.f32 %v831, %v808
  %v833 = vadd.f32 %v832, %v809
  %v834 = vadd.f32 %v833, %v810
  %v835 = vadd.f32 %v834, %v811
  %v836 = vadd.f32 %v835, %v812
  %v837 = vadd.f32 %v836, %v813
  %v838 = vadd.f32 %v837, %v814
  %v839 = vadd.f32 %v838, %v815
  %v840 = vadd.f32 %v839, %v816
  %v841 = vadd.f32 %v840, %v817
  %v842 = vadd.f32 %v841, %v818
  %v843 = vadd.f32 %v842, %v819
  %v844 = vadd.f32 %v843, %v820
  %v845 = vadd.f32 %v844, %v821
  %v846 = vadd.f32 %v845, %v822
  %v847 = vadd.f32 %v846, %v823
  %v848 = vadd.f32 %v847, %v824
  %v849 = vadd.f32 %v848, %v825
  %v850 = vadd.f32 %v849, %v826
  %v851 = vrot.slane %v850, 4
  %v852 = vadd.f32 %v850, %v851
  %v853 = vrot.slane %v852, 2
  %v854 = vadd.f32 %v852, %v853
  %v855 = vrot.slane %v854, 1
  %v856 = vadd.f32 %v854, %v855
  %v857 = vmul.f32 %v856, 0.005
  %v858 = vld [vmem:[%s5] sm:$0x1]
  %v859 = vadd.f32 %v857, 1e-05
  %v860 = vrsqrt.pop %v859
  %v861 = vmul.f32 %v858, %v860
  %v863 = vlaneseq
  %v864 = vshrl.u32 %v863, 7
  %v865 = vsub.s32 0, %v864
  %v866 = vrot.slane %v861, %v865
  %v868 = vmul.f32 %v777, %v866
  %v869 = vmul.f32 %v778, %v866
  %v870 = vmul.f32 %v779, %v866
  %v871 = vmul.f32 %v780, %v866
  %v872 = vmul.f32 %v781, %v866
  %v873 = vmul.f32 %v782, %v866
  %v874 = vmul.f32 %v783, %v866
  %v875 = vmul.f32 %v784, %v866
  %v876 = vmul.f32 %v785, %v866
  %v877 = vmul.f32 %v786, %v866
  %v878 = vmul.f32 %v787, %v866
  %v879 = vmul.f32 %v788, %v866
  %v880 = vmul.f32 %v789, %v866
  %v881 = vmul.f32 %v790, %v866
  %v882 = vmul.f32 %v791, %v866
  %v883 = vmul.f32 %v792, %v866
  %v884 = vmul.f32 %v793, %v866
  %v885 = vmul.f32 %v794, %v866
  %v886 = vmul.f32 %v795, %v866
  %v887 = vmul.f32 %v796, %v866
  %v888 = vmul.f32 %v797, %v866
  %v889 = vmul.f32 %v798, %v866
  %v890 = vmul.f32 %v799, %v866
  %v891 = vmul.f32 %v800, %v866
  %v892 = vmul.f32 %v801, %v866
  %v893 = vld [vmem:[%s6] sm:$0x1]
  %v895 = vlaneseq
  %v896 = vshrl.u32 %v895, 7
  %v897 = vsub.s32 0, %v896
  %v898 = vrot.slane %v893, %v897
  %v900 = vadd.f32 %v868, %v898
  %v901 = vadd.f32 %v869, %v898
  %v902 = vadd.f32 %v870, %v898
  %v903 = vadd.f32 %v871, %v898
  %v904 = vadd.f32 %v872, %v898
  %v905 = vadd.f32 %v873, %v898
  %v906 = vadd.f32 %v874, %v898
  %v907 = vadd.f32 %v875, %v898
  %v908 = vadd.f32 %v876, %v898
  %v909 = vadd.f32 %v877, %v898
  %v910 = vadd.f32 %v878, %v898
  %v911 = vadd.f32 %v879, %v898
  %v912 = vadd.f32 %v880, %v898
  %v913 = vadd.f32 %v881, %v898
  %v914 = vadd.f32 %v882, %v898
  %v915 = vadd.f32 %v883, %v898
  %v916 = vadd.f32 %v884, %v898
  %v917 = vadd.f32 %v885, %v898
  %v918 = vadd.f32 %v886, %v898
  %v919 = vadd.f32 %v887, %v898
  %v920 = vadd.f32 %v888, %v898
  %v921 = vadd.f32 %v889, %v898
  %v922 = vadd.f32 %v890, %v898
  %v923 = vadd.f32 %v891, %v898
  %v924 = vadd.f32 %v892, %v898
  %v925 = vmax.f32 %v900, 0.0
  %v926 = vmax.f32 %v901, 0.0
  %v927 = vmax.f32 %v902, 0.0
  %v928 = vmax.f32 %v903, 0.0
  %v929 = vmax.f32 %v904, 0.0
  %v930 = vmax.f32 %v905, 0.0
  %v931 = vmax.f32 %v906, 0.0
  %v932 = vmax.f32 %v907, 0.0
  %v933 = vmax.f32 %v908, 0.0
  %v934 = vmax.f32 %v909, 0.0
  %v935 = vmax.f32 %v910, 0.0
  %v936 = vmax.f32 %v911, 0.0
  %v937 = vmax.f32 %v912, 0.0
  %v938 = vmax.f32 %v913, 0.0
  %v939 = vmax.f32 %v914, 0.0
  %v940 = vmax.f32 %v915, 0.0
  %v941 = vmax.f32 %v916, 0.0
  %v942 = vmax.f32 %v917, 0.0
  %v943 = vmax.f32 %v918, 0.0
  %v944 = vmax.f32 %v919, 0.0
  %v945 = vmax.f32 %v920, 0.0
  %v946 = vmax.f32 %v921, 0.0
  %v947 = vmax.f32 %v922, 0.0
  %v948 = vmax.f32 %v923, 0.0
  %v949 = vmax.f32 %v924, 0.0
  %v950 = vpack.c.bf16 %v926, %v925
  %v951 = vpack.c.bf16 %v928, %v927
  %v952 = vpack.c.bf16 %v930, %v929
  %v953 = vpack.c.bf16 %v932, %v931
  %v954 = vpack.c.bf16 %v934, %v933
  %v955 = vpack.c.bf16 %v936, %v935
  %v956 = vpack.c.bf16 %v938, %v937
  %v957 = vpack.c.bf16 %v940, %v939
  %v958 = vpack.c.bf16 %v942, %v941
  %v959 = vpack.c.bf16 %v944, %v943
  %v960 = vpack.c.bf16 %v946, %v945
  %v961 = vpack.c.bf16 %v948, %v947
  %v962 = vpack.c.bf16 %v949, %v949
  %v963 = vld [vmem:[%s7] sm:$0xf]
  %v964 = vld [vmem:[%s7 + $0x4] sm:$0xf]
  %v965 = vld [vmem:[%s7 + $0x8] sm:$0xf]
  %v966 = vld [vmem:[%s7 + $0xc] sm:$0xf]
  %v967 = vld [vmem:[%s7 + $0x10] sm:$0xf]
  %v968 = vld [vmem:[%s7 + $0x14] sm:$0xf]
  %v969 = vld [vmem:[%s7 + $0x18] sm:$0xf]
  %v970 = vld [vmem:[%s7 + $0x1c] sm:$0xf]
  %v971 = vld [vmem:[%s7 + $0x20] sm:$0xf]
  %v972 = vld [vmem:[%s7 + $0x24] sm:$0xf]
  %v973 = vld [vmem:[%s7 + $0x28] sm:$0xf]
  %v974 = vld [vmem:[%s7 + $0x2c] sm:$0xf]
  %v975 = vld [vmem:[%s7 + $0x30] sm:$0xf]
  %v976 = vld [vmem:[%s7 + $0x34] sm:$0xf]
  %v977 = vld [vmem:[%s7 + $0x38] sm:$0xf]
  %v978 = vld [vmem:[%s7 + $0x3c] sm:$0xf]
  %v979 = vld [vmem:[%s8] sm:$0x1]
  %v981 = vlaneseq
  %v982 = vshrl.u32 %v981, 7
  %v983 = vsub.s32 0, %v982
  %v984 = vrot.slane %v979, %v983
  %v1002 = vunpack.c.l.b16 %v963
  %v1003 = vunpack.c.l.b16 %v964
  %v1004 = vunpack.c.l.b16 %v965
  %v1005 = vunpack.c.l.b16 %v966
  %v1006 = vunpack.c.l.b16 %v967
  %v1007 = vunpack.c.l.b16 %v968
  %v1008 = vunpack.c.l.b16 %v969
  %v1009 = vunpack.c.l.b16 %v970
  %v1010 = vunpack.c.l.b16 %v971
  %v1011 = vunpack.c.l.b16 %v972
  %v1012 = vunpack.c.l.b16 %v973
  %v1013 = vunpack.c.l.b16 %v974
  %v1014 = vunpack.c.l.b16 %v975
  %v1015 = vunpack.c.l.b16 %v976
  %v1016 = vunpack.c.l.b16 %v977
  %v1017 = vunpack.c.l.b16 %v978
  %v1018 = vpack.c.b16 %v1003, %v1002
  %v1019 = vpack.c.b16 %v1005, %v1004
  %v1020 = vpack.c.b16 %v1007, %v1006
  %v1021 = vpack.c.b16 %v1009, %v1008
  %v1022 = vpack.c.b16 %v1011, %v1010
  %v1023 = vpack.c.b16 %v1013, %v1012
  %v1024 = vpack.c.b16 %v1015, %v1014
  %v1025 = vpack.c.b16 %v1017, %v1016
  %1034 = vmatprep.subr.bf16.mxu0 0
  %1035 = vmatpush1.bf16.msra.mxu0 %v1018
  %1036 = vmatprep.subr.bf16.mxu0 0
  %1037 = vmatpush1.bf16.msra.mxu0 %v1019
  %1038 = vmatprep.subr.bf16.mxu0 0
  %1039 = vmatpush1.bf16.msra.mxu0 %v1020
  %1040 = vmatprep.subr.bf16.mxu0 0
  %1041 = vmatpush1.bf16.msra.mxu0 %v1021
  %1042 = vmatprep.subr.bf16.mxu0 0
  %1043 = vmatpush1.bf16.msra.mxu0 %v1022
  %1044 = vmatprep.subr.bf16.mxu0 0
  %1045 = vmatpush1.bf16.msra.mxu0 %v1023
  %1046 = vmatprep.subr.bf16.mxu0 0
  %1047 = vmatpush1.bf16.msra.mxu0 %v1024
  %1048 = vmatprep.subr.bf16.mxu0 0
  %1049 = vmatpush1.bf16.msra.mxu0 %v1025
  %1050 = vmatprep.subr.bf16.mxu0 0
  %1051 = vmatpush1.bf16.msra.mxu0 0
  %1052 = vmatprep.subr.bf16.mxu0 0
  %1053 = vmatpush1.bf16.msra.mxu0 0
  %1054 = vmatprep.subr.bf16.mxu0 0
  %1055 = vmatpush1.bf16.msra.mxu0 0
  %1056 = vmatprep.subr.bf16.mxu0 0
  %1057 = vmatpush1.bf16.msra.mxu0 0
  %1058 = vmatprep.subr.bf16.mxu0 0
  %1059 = vmatpush1.bf16.msra.mxu0 0
  %1060 = vmatprep.subr.bf16.mxu0 0
  %1061 = vmatpush1.bf16.msra.mxu0 0
  %1062 = vmatprep.subr.bf16.mxu0 0
  %1063 = vmatpush1.bf16.msra.mxu0 0
  %1064 = vmatprep.subr.bf16.mxu0 0
  %1065 = vmatpush1.bf16.msra.mxu0 0
  %1066 = vmatprep.mubr.bf16.mxu0 0
  %1067 = vmatmul.mubr.bf16.gmra.mrb[0].mxu0 %v950
  %v1068 = vpop.f32.mrb[0].mxu0
  %v1069 = vadd.f32 %v984, %v1068
  %v1070 = vpop.f32.mrb[0].mxu0
  %v1071 = vpop.f32.mrb[0].mxu0
  %v1072 = vadd.f32 %v984, %v1071
  %v1073 = vpop.f32.mrb[0].mxu0
  %1074 = vmatprep.mubr.bf16.mxu0 0
  %1075 = vmatmul.mubr.bf16.gmra.mrb[0].mxu0 %v951
  %v1076 = vpop.f32.mrb[0].mxu0
  %v1077 = vadd.f32 %v984, %v1076
  %v1078 = vpop.f32.mrb[0].mxu0
  %v1079 = vpop.f32.mrb[0].mxu0
  %v1080 = vadd.f32 %v984, %v1079
  %v1081 = vpop.f32.mrb[0].mxu0
  %1082 = vmatprep.mubr.bf16.mxu0 0
  %1083 = vmatmul.mubr.bf16.gmra.mrb[0].mxu0 %v952
  %v1084 = vpop.f32.mrb[0].mxu0
  %v1085 = vadd.f32 %v984, %v1084
  %v1086 = vpop.f32.mrb[0].mxu0
  %v1087 = vpop.f32.mrb[0].mxu0
  %v1088 = vadd.f32 %v984, %v1087
  %v1089 = vpop.f32.mrb[0].mxu0
  %1090 = vmatprep.mubr.bf16.mxu0 0
  %1091 = vmatmul.mubr.bf16.gmra.mrb[0].mxu0 %v953
  %v1092 = vpop.f32.mrb[0].mxu0
  %v1093 = vadd.f32 %v984, %v1092
  %v1094 = vpop.f32.mrb[0].mxu0
  %v1095 = vpop.f32.mrb[0].mxu0
  %v1096 = vadd.f32 %v984, %v1095
  %v1097 = vpop.f32.mrb[0].mxu0
  %1098 = vmatprep.mubr.bf16.mxu0 0
  %1099 = vmatmul.mubr.bf16.gmra.mrb[0].mxu0 %v954
  %v1100 = vpop.f32.mrb[0].mxu0
  %v1101 = vadd.f32 %v984, %v1100
  %v1102 = vpop.f32.mrb[0].mxu0
  %v1103 = vpop.f32.mrb[0].mxu0
  %v1104 = vadd.f32 %v984, %v1103
  %v1105 = vpop.f32.mrb[0].mxu0
  %1106 = vmatprep.mubr.bf16.mxu0 0
  %1107 = vmatmul.mubr.bf16.gmra.mrb[0].mxu0 %v955
  %v1108 = vpop.f32.mrb[0].mxu0
  %v1109 = vadd.f32 %v984, %v1108
  %v1110 = vpop.f32.mrb[0].mxu0
  %v1111 = vpop.f32.mrb[0].mxu0
  %v1112 = vadd.f32 %v984, %v1111
  %v1113 = vpop.f32.mrb[0].mxu0
  %1114 = vmatprep.mubr.bf16.mxu0 0
  %1115 = vmatmul.mubr.bf16.gmra.mrb[0].mxu0 %v956
  %v1116 = vpop.f32.mrb[0].mxu0
  %v1117 = vadd.f32 %v984, %v1116
  %v1118 = vpop.f32.mrb[0].mxu0
  %v1119 = vpop.f32.mrb[0].mxu0
  %v1120 = vadd.f32 %v984, %v1119
  %v1121 = vpop.f32.mrb[0].mxu0
  %1122 = vmatprep.mubr.bf16.mxu0 0
  %1123 = vmatmul.mubr.bf16.gmra.mrb[0].mxu0 %v957
  %v1124 = vpop.f32.mrb[0].mxu0
  %v1125 = vadd.f32 %v984, %v1124
  %v1126 = vpop.f32.mrb[0].mxu0
  %v1127 = vpop.f32.mrb[0].mxu0
  %v1128 = vadd.f32 %v984, %v1127
  %v1129 = vpop.f32.mrb[0].mxu0
  %1130 = vmatprep.mubr.bf16.mxu0 0
  %1131 = vmatmul.mubr.bf16.gmra.mrb[0].mxu0 %v958
  %v1132 = vpop.f32.mrb[0].mxu0
  %v1133 = vadd.f32 %v984, %v1132
  %v1134 = vpop.f32.mrb[0].mxu0
  %v1135 = vpop.f32.mrb[0].mxu0
  %v1136 = vadd.f32 %v984, %v1135
  %v1137 = vpop.f32.mrb[0].mxu0
  %1138 = vmatprep.mubr.bf16.mxu0 0
  %1139 = vmatmul.mubr.bf16.gmra.mrb[0].mxu0 %v959
  %v1140 = vpop.f32.mrb[0].mxu0
  %v1141 = vadd.f32 %v984, %v1140
  %v1142 = vpop.f32.mrb[0].mxu0
  %v1143 = vpop.f32.mrb[0].mxu0
  %v1144 = vadd.f32 %v984, %v1143
  %v1145 = vpop.f32.mrb[0].mxu0
  %1146 = vmatprep.mubr.bf16.mxu0 0
  %1147 = vmatmul.mubr.bf16.gmra.mrb[0].mxu0 %v960
  %v1148 = vpop.f32.mrb[0].mxu0
  %v1149 = vadd.f32 %v984, %v1148
  %v1150 = vpop.f32.mrb[0].mxu0
  %v1151 = vpop.f32.mrb[0].mxu0
  %v1152 = vadd.f32 %v984, %v1151
  %v1153 = vpop.f32.mrb[0].mxu0
  %1154 = vmatprep.mubr.bf16.mxu0 0
  %1155 = vmatmul.mubr.bf16.gmra.mrb[0].mxu0 %v961
  %v1156 = vpop.f32.mrb[0].mxu0
  %v1157 = vadd.f32 %v984, %v1156
  %v1158 = vpop.f32.mrb[0].mxu0
  %v1159 = vpop.f32.mrb[0].mxu0
  %v1160 = vadd.f32 %v984, %v1159
  %v1161 = vpop.f32.mrb[0].mxu0
  %1162 = vmatprep.mubr.bf16.mxu0 0
  %1163 = vmatmul.mubr.bf16.gmra.mrb[0].mxu0 %v962
  %v1164 = vpop.f32.mrb[0].mxu0
  %v1165 = vadd.f32 %v984, %v1164
  %v1166 = vpop.f32.mrb[0].mxu0
  %v1167 = vpop.f32.mrb[0].mxu0
  %v1168 = vpop.f32.mrb[0].mxu0
  %1169 = vdwg.mxu0
  %vm1170 = vcmask 80896
  %v1171 = vsel %vm1170, %v1069, -inf
  %1172 = vmax.xlane.f32.xlu0 %v1171
  %v1173 = vpop.xlane.xlu0 %1172
  %v1174 = vsel %vm1170, %v1072, -inf
  %1175 = vmax.xlane.f32.xlu0 %v1174
  %v1176 = vpop.xlane.xlu0 %1175
  %v1177 = vsel %vm1170, %v1077, -inf
  %1178 = vmax.xlane.f32.xlu0 %v1177
  %v1179 = vpop.xlane.xlu0 %1178
  %v1180 = vsel %vm1170, %v1080, -inf
  %1181 = vmax.xlane.f32.xlu0 %v1180
  %v1182 = vpop.xlane.xlu0 %1181
  %v1183 = vsel %vm1170, %v1085, -inf
  %1184 = vmax.xlane.f32.xlu0 %v1183
  %v1185 = vpop.xlane.xlu0 %1184
  %v1186 = vsel %vm1170, %v1088, -inf
  %1187 = vmax.xlane.f32.xlu0 %v1186
  %v1188 = vpop.xlane.xlu0 %1187
  %v1189 = vsel %vm1170, %v1093, -inf
  %1190 = vmax.xlane.f32.xlu0 %v1189
  %v1191 = vpop.xlane.xlu0 %1190
  %v1192 = vsel %vm1170, %v1096, -inf
  %1193 = vmax.xlane.f32.xlu0 %v1192
  %v1194 = vpop.xlane.xlu0 %1193
  %v1195 = vsel %vm1170, %v1101, -inf
  %1196 = vmax.xlane.f32.xlu0 %v1195
  %v1197 = vpop.xlane.xlu0 %1196
  %v1198 = vsel %vm1170, %v1104, -inf
  %1199 = vmax.xlane.f32.xlu0 %v1198
  %v1200 = vpop.xlane.xlu0 %1199
  %v1201 = vsel %vm1170, %v1109, -inf
  %1202 = vmax.xlane.f32.xlu0 %v1201
  %v1203 = vpop.xlane.xlu0 %1202
  %v1204 = vsel %vm1170, %v1112, -inf
  %1205 = vmax.xlane.f32.xlu0 %v1204
  %v1206 = vpop.xlane.xlu0 %1205
  %v1207 = vsel %vm1170, %v1117, -inf
  %1208 = vmax.xlane.f32.xlu0 %v1207
  %v1209 = vpop.xlane.xlu0 %1208
  %v1210 = vsel %vm1170, %v1120, -inf
  %1211 = vmax.xlane.f32.xlu0 %v1210
  %v1212 = vpop.xlane.xlu0 %1211
  %v1213 = vsel %vm1170, %v1125, -inf
  %1214 = vmax.xlane.f32.xlu0 %v1213
  %v1215 = vpop.xlane.xlu0 %1214
  %v1216 = vsel %vm1170, %v1128, -inf
  %1217 = vmax.xlane.f32.xlu0 %v1216
  %v1218 = vpop.xlane.xlu0 %1217
  %v1219 = vsel %vm1170, %v1133, -inf
  %1220 = vmax.xlane.f32.xlu0 %v1219
  %v1221 = vpop.xlane.xlu0 %1220
  %v1222 = vsel %vm1170, %v1136, -inf
  %1223 = vmax.xlane.f32.xlu0 %v1222
  %v1224 = vpop.xlane.xlu0 %1223
  %v1225 = vsel %vm1170, %v1141, -inf
  %1226 = vmax.xlane.f32.xlu0 %v1225
  %v1227 = vpop.xlane.xlu0 %1226
  %v1228 = vsel %vm1170, %v1144, -inf
  %1229 = vmax.xlane.f32.xlu0 %v1228
  %v1230 = vpop.xlane.xlu0 %1229
  %v1231 = vsel %vm1170, %v1149, -inf
  %1232 = vmax.xlane.f32.xlu0 %v1231
  %v1233 = vpop.xlane.xlu0 %1232
  %v1234 = vsel %vm1170, %v1152, -inf
  %1235 = vmax.xlane.f32.xlu0 %v1234
  %v1236 = vpop.xlane.xlu0 %1235
  %v1237 = vsel %vm1170, %v1157, -inf
  %1238 = vmax.xlane.f32.xlu0 %v1237
  %v1239 = vpop.xlane.xlu0 %1238
  %v1240 = vsel %vm1170, %v1160, -inf
  %1241 = vmax.xlane.f32.xlu0 %v1240
  %v1242 = vpop.xlane.xlu0 %1241
  %v1243 = vsel %vm1170, %v1165, -inf
  %1244 = vmax.xlane.f32.xlu0 %v1243
  %v1245 = vpop.xlane.xlu0 %1244
  %v1246 = vsub.f32 %v1069, %v1173
  %v1247 = vsub.f32 %v1072, %v1176
  %v1248 = vsub.f32 %v1077, %v1179
  %v1249 = vsub.f32 %v1080, %v1182
  %v1250 = vsub.f32 %v1085, %v1185
  %v1251 = vsub.f32 %v1088, %v1188
  %v1252 = vsub.f32 %v1093, %v1191
  %v1253 = vsub.f32 %v1096, %v1194
  %v1254 = vsub.f32 %v1101, %v1197
  %v1255 = vsub.f32 %v1104, %v1200
  %v1256 = vsub.f32 %v1109, %v1203
  %v1257 = vsub.f32 %v1112, %v1206
  %v1258 = vsub.f32 %v1117, %v1209
  %v1259 = vsub.f32 %v1120, %v1212
  %v1260 = vsub.f32 %v1125, %v1215
  %v1261 = vsub.f32 %v1128, %v1218
  %v1262 = vsub.f32 %v1133, %v1221
  %v1263 = vsub.f32 %v1136, %v1224
  %v1264 = vsub.f32 %v1141, %v1227
  %v1265 = vsub.f32 %v1144, %v1230
  %v1266 = vsub.f32 %v1149, %v1233
  %v1267 = vsub.f32 %v1152, %v1236
  %v1268 = vsub.f32 %v1157, %v1239
  %v1269 = vsub.f32 %v1160, %v1242
  %v1270 = vsub.f32 %v1165, %v1245
  %v1271 = vmul.f32 %v1246, 1.442695
  %v1272 = vpow.pop %v1271
  %v1273 = vmul.f32 %v1247, 1.442695
  %v1274 = vpow.pop %v1273
  %v1275 = vmul.f32 %v1248, 1.442695
  %v1276 = vpow.pop %v1275
  %v1277 = vmul.f32 %v1249, 1.442695
  %v1278 = vpow.pop %v1277
  %v1279 = vmul.f32 %v1250, 1.442695
  %v1280 = vpow.pop %v1279
  %v1281 = vmul.f32 %v1251, 1.442695
  %v1282 = vpow.pop %v1281
  %v1283 = vmul.f32 %v1252, 1.442695
  %v1284 = vpow.pop %v1283
  %v1285 = vmul.f32 %v1253, 1.442695
  %v1286 = vpow.pop %v1285
  %v1287 = vmul.f32 %v1254, 1.442695
  %v1288 = vpow.pop %v1287
  %v1289 = vmul.f32 %v1255, 1.442695
  %v1290 = vpow.pop %v1289
  %v1291 = vmul.f32 %v1256, 1.442695
  %v1292 = vpow.pop %v1291
  %v1293 = vmul.f32 %v1257, 1.442695
  %v1294 = vpow.pop %v1293
  %v1295 = vmul.f32 %v1258, 1.442695
  %v1296 = vpow.pop %v1295
  %v1297 = vmul.f32 %v1259, 1.442695
  %v1298 = vpow.pop %v1297
  %v1299 = vmul.f32 %v1260, 1.442695
  %v1300 = vpow.pop %v1299
  %v1301 = vmul.f32 %v1261, 1.442695
  %v1302 = vpow.pop %v1301
  %v1303 = vmul.f32 %v1262, 1.442695
  %v1304 = vpow.pop %v1303
  %v1305 = vmul.f32 %v1263, 1.442695
  %v1306 = vpow.pop %v1305
  %v1307 = vmul.f32 %v1264, 1.442695
  %v1308 = vpow.pop %v1307
  %v1309 = vmul.f32 %v1265, 1.442695
  %v1310 = vpow.pop %v1309
  %v1311 = vmul.f32 %v1266, 1.442695
  %v1312 = vpow.pop %v1311
  %v1313 = vmul.f32 %v1267, 1.442695
  %v1314 = vpow.pop %v1313
  %v1315 = vmul.f32 %v1268, 1.442695
  %v1316 = vpow.pop %v1315
  %v1317 = vmul.f32 %v1269, 1.442695
  %v1318 = vpow.pop %v1317
  %v1319 = vmul.f32 %v1270, 1.442695
  %v1320 = vpow.pop %v1319
  %v1321 = vsel %vm1170, %v1272, 0.0
  %1322 = vadd.xlane.f32.xlu0 %v1321
  %v1323 = vpop.xlane.xlu0 %1322
  %v1324 = vsel %vm1170, %v1274, 0.0
  %1325 = vadd.xlane.f32.xlu0 %v1324
  %v1326 = vpop.xlane.xlu0 %1325
  %v1327 = vsel %vm1170, %v1276, 0.0
  %1328 = vadd.xlane.f32.xlu0 %v1327
  %v1329 = vpop.xlane.xlu0 %1328
  %v1330 = vsel %vm1170, %v1278, 0.0
  %1331 = vadd.xlane.f32.xlu0 %v1330
  %v1332 = vpop.xlane.xlu0 %1331
  %v1333 = vsel %vm1170, %v1280, 0.0
  %1334 = vadd.xlane.f32.xlu0 %v1333
  %v1335 = vpop.xlane.xlu0 %1334
  %v1336 = vsel %vm1170, %v1282, 0.0
  %1337 = vadd.xlane.f32.xlu0 %v1336
  %v1338 = vpop.xlane.xlu0 %1337
  %v1339 = vsel %vm1170, %v1284, 0.0
  %1340 = vadd.xlane.f32.xlu0 %v1339
  %v1341 = vpop.xlane.xlu0 %1340
  %v1342 = vsel %vm1170, %v1286, 0.0
  %1343 = vadd.xlane.f32.xlu0 %v1342
  %v1344 = vpop.xlane.xlu0 %1343
  %v1345 = vsel %vm1170, %v1288, 0.0
  %1346 = vadd.xlane.f32.xlu0 %v1345
  %v1347 = vpop.xlane.xlu0 %1346
  %v1348 = vsel %vm1170, %v1290, 0.0
  %1349 = vadd.xlane.f32.xlu0 %v1348
  %v1350 = vpop.xlane.xlu0 %1349
  %v1351 = vsel %vm1170, %v1292, 0.0
  %1352 = vadd.xlane.f32.xlu0 %v1351
  %v1353 = vpop.xlane.xlu0 %1352
  %v1354 = vsel %vm1170, %v1294, 0.0
  %1355 = vadd.xlane.f32.xlu0 %v1354
  %v1356 = vpop.xlane.xlu0 %1355
  %v1357 = vsel %vm1170, %v1296, 0.0
  %1358 = vadd.xlane.f32.xlu0 %v1357
  %v1359 = vpop.xlane.xlu0 %1358
  %v1360 = vsel %vm1170, %v1298, 0.0
  %1361 = vadd.xlane.f32.xlu0 %v1360
  %v1362 = vpop.xlane.xlu0 %1361
  %v1363 = vsel %vm1170, %v1300, 0.0
  %1364 = vadd.xlane.f32.xlu0 %v1363
  %v1365 = vpop.xlane.xlu0 %1364
  %v1366 = vsel %vm1170, %v1302, 0.0
  %1367 = vadd.xlane.f32.xlu0 %v1366
  %v1368 = vpop.xlane.xlu0 %1367
  %v1369 = vsel %vm1170, %v1304, 0.0
  %1370 = vadd.xlane.f32.xlu0 %v1369
  %v1371 = vpop.xlane.xlu0 %1370
  %v1372 = vsel %vm1170, %v1306, 0.0
  %1373 = vadd.xlane.f32.xlu0 %v1372
  %v1374 = vpop.xlane.xlu0 %1373
  %v1375 = vsel %vm1170, %v1308, 0.0
  %1376 = vadd.xlane.f32.xlu0 %v1375
  %v1377 = vpop.xlane.xlu0 %1376
  %v1378 = vsel %vm1170, %v1310, 0.0
  %1379 = vadd.xlane.f32.xlu0 %v1378
  %v1380 = vpop.xlane.xlu0 %1379
  %v1381 = vsel %vm1170, %v1312, 0.0
  %1382 = vadd.xlane.f32.xlu0 %v1381
  %v1383 = vpop.xlane.xlu0 %1382
  %v1384 = vsel %vm1170, %v1314, 0.0
  %1385 = vadd.xlane.f32.xlu0 %v1384
  %v1386 = vpop.xlane.xlu0 %1385
  %v1387 = vsel %vm1170, %v1316, 0.0
  %1388 = vadd.xlane.f32.xlu0 %v1387
  %v1389 = vpop.xlane.xlu0 %1388
  %v1390 = vsel %vm1170, %v1318, 0.0
  %1391 = vadd.xlane.f32.xlu0 %v1390
  %v1392 = vpop.xlane.xlu0 %1391
  %v1393 = vsel %vm1170, %v1320, 0.0
  %1394 = vadd.xlane.f32.xlu0 %v1393
  %v1395 = vpop.xlane.xlu0 %1394
  %v1396 = vlog2.pop %v1323
  %v1397 = vmul.f32 %v1396, 0.6931472
  %v1398 = vlog2.pop %v1326
  %v1399 = vmul.f32 %v1398, 0.6931472
  %v1400 = vlog2.pop %v1329
  %v1401 = vmul.f32 %v1400, 0.6931472
  %v1402 = vlog2.pop %v1332
  %v1403 = vmul.f32 %v1402, 0.6931472
  %v1404 = vlog2.pop %v1335
  %v1405 = vmul.f32 %v1404, 0.6931472
  %v1406 = vlog2.pop %v1338
  %v1407 = vmul.f32 %v1406, 0.6931472
  %v1408 = vlog2.pop %v1341
  %v1409 = vmul.f32 %v1408, 0.6931472
  %v1410 = vlog2.pop %v1344
  %v1411 = vmul.f32 %v1410, 0.6931472
  %v1412 = vlog2.pop %v1347
  %v1413 = vmul.f32 %v1412, 0.6931472
  %v1414 = vlog2.pop %v1350
  %v1415 = vmul.f32 %v1414, 0.6931472
  %v1416 = vlog2.pop %v1353
  %v1417 = vmul.f32 %v1416, 0.6931472
  %v1418 = vlog2.pop %v1356
  %v1419 = vmul.f32 %v1418, 0.6931472
  %v1420 = vlog2.pop %v1359
  %v1421 = vmul.f32 %v1420, 0.6931472
  %v1422 = vlog2.pop %v1362
  %v1423 = vmul.f32 %v1422, 0.6931472
  %v1424 = vlog2.pop %v1365
  %v1425 = vmul.f32 %v1424, 0.6931472
  %v1426 = vlog2.pop %v1368
  %v1427 = vmul.f32 %v1426, 0.6931472
  %v1428 = vlog2.pop %v1371
  %v1429 = vmul.f32 %v1428, 0.6931472
  %v1430 = vlog2.pop %v1374
  %v1431 = vmul.f32 %v1430, 0.6931472
  %v1432 = vlog2.pop %v1377
  %v1433 = vmul.f32 %v1432, 0.6931472
  %v1434 = vlog2.pop %v1380
  %v1435 = vmul.f32 %v1434, 0.6931472
  %v1436 = vlog2.pop %v1383
  %v1437 = vmul.f32 %v1436, 0.6931472
  %v1438 = vlog2.pop %v1386
  %v1439 = vmul.f32 %v1438, 0.6931472
  %v1440 = vlog2.pop %v1389
  %v1441 = vmul.f32 %v1440, 0.6931472
  %v1442 = vlog2.pop %v1392
  %v1443 = vmul.f32 %v1442, 0.6931472
  %v1444 = vlog2.pop %v1395
  %v1445 = vmul.f32 %v1444, 0.6931472
  %v1446 = vsub.f32 %v1246, %v1397
  %v1447 = vsub.f32 %v1247, %v1399
  %v1448 = vsub.f32 %v1248, %v1401
  %v1449 = vsub.f32 %v1249, %v1403
  %v1450 = vsub.f32 %v1250, %v1405
  %v1451 = vsub.f32 %v1251, %v1407
  %v1452 = vsub.f32 %v1252, %v1409
  %v1453 = vsub.f32 %v1253, %v1411
  %v1454 = vsub.f32 %v1254, %v1413
  %v1455 = vsub.f32 %v1255, %v1415
  %v1456 = vsub.f32 %v1256, %v1417
  %v1457 = vsub.f32 %v1257, %v1419
  %v1458 = vsub.f32 %v1258, %v1421
  %v1459 = vsub.f32 %v1259, %v1423
  %v1460 = vsub.f32 %v1260, %v1425
  %v1461 = vsub.f32 %v1261, %v1427
  %v1462 = vsub.f32 %v1262, %v1429
  %v1463 = vsub.f32 %v1263, %v1431
  %v1464 = vsub.f32 %v1264, %v1433
  %v1465 = vsub.f32 %v1265, %v1435
  %v1466 = vsub.f32 %v1266, %v1437
  %v1467 = vsub.f32 %v1267, %v1439
  %v1468 = vsub.f32 %v1268, %v1441
  %v1469 = vsub.f32 %v1269, %v1443
  %v1470 = vsub.f32 %v1270, %v1445
  %1471 = vst.msk [vmem:[%s9] sm:$0xff] %vm1170, %v1446
  %1472 = vst.msk [vmem:[%s9 + $0x8] sm:$0xff] %vm1170, %v1447
  %1473 = vst.msk [vmem:[%s9 + $0x10] sm:$0xff] %vm1170, %v1448
  %1474 = vst.msk [vmem:[%s9 + $0x18] sm:$0xff] %vm1170, %v1449
  %1475 = vst.msk [vmem:[%s9 + $0x20] sm:$0xff] %vm1170, %v1450
  %1476 = vst.msk [vmem:[%s9 + $0x28] sm:$0xff] %vm1170, %v1451
  %1477 = vst.msk [vmem:[%s9 + $0x30] sm:$0xff] %vm1170, %v1452
  %1478 = vst.msk [vmem:[%s9 + $0x38] sm:$0xff] %vm1170, %v1453
  %1479 = vst.msk [vmem:[%s9 + $0x40] sm:$0xff] %vm1170, %v1454
  %1480 = vst.msk [vmem:[%s9 + $0x48] sm:$0xff] %vm1170, %v1455
  %1481 = vst.msk [vmem:[%s9 + $0x50] sm:$0xff] %vm1170, %v1456
  %1482 = vst.msk [vmem:[%s9 + $0x58] sm:$0xff] %vm1170, %v1457
  %1483 = vst.msk [vmem:[%s9 + $0x60] sm:$0xff] %vm1170, %v1458
  %1484 = vst.msk [vmem:[%s9 + $0x68] sm:$0xff] %vm1170, %v1459
  %1485 = vst.msk [vmem:[%s9 + $0x70] sm:$0xff] %vm1170, %v1460
  %1486 = vst.msk [vmem:[%s9 + $0x78] sm:$0xff] %vm1170, %v1461
  %1487 = vst.msk [vmem:[%s9 + $0x80] sm:$0xff] %vm1170, %v1462
  %1488 = vst.msk [vmem:[%s9 + $0x88] sm:$0xff] %vm1170, %v1463
  %1489 = vst.msk [vmem:[%s9 + $0x90] sm:$0xff] %vm1170, %v1464
  %1490 = vst.msk [vmem:[%s9 + $0x98] sm:$0xff] %vm1170, %v1465
  %1491 = vst.msk [vmem:[%s9 + $0xa0] sm:$0xff] %vm1170, %v1466
  %1492 = vst.msk [vmem:[%s9 + $0xa8] sm:$0xff] %vm1170, %v1467
  %1493 = vst.msk [vmem:[%s9 + $0xb0] sm:$0xff] %vm1170, %v1468
  %1494 = vst.msk [vmem:[%s9 + $0xb8] sm:$0xff] %vm1170, %v1469
  %1495 = vst.msk [vmem:[%s9 + $0xc0] sm:$0xff] %vm1170, %v1470
  // Predicated region
  $region38: #{tpu_custom_call.1} parent=0 // pred_check
    _
  $region39: #{tpu_custom_call.1} parent=0 // pred_check_branch
    %1497 = sbr.rel (0) target = $region41
  $region40: #{tpu_custom_call.1} parent=0 // pred_region
    _
  $region41: #{tpu_custom_call.1} parent=0 // pred_fallthru
    _
  // Predicated region
  $region42: #{tpu_custom_call.1} parent=0 // pred_check
    _
  $region43: #{tpu_custom_call.1} parent=0 // pred_check_branch
    %1499 = sbr.rel (0) target = $region45
  $region44: #{tpu_custom_call.1} parent=0 // pred_region
    _
  $region45: #{tpu_custom_call.1} parent=0 // pred_fallthru
    _

</llo_original>
